<compile_context>
chip_gen: v6e
topology: v6e:2x2x1
jax: 0.10.0
libtpu: 0.0.40
codegen_flags: <defaults>
</compile_context>

<pallas_src>
import math

import jax
import jax.numpy as jnp
from jax import lax
from jax.experimental import pallas as pl
from jax.experimental.pallas import tpu as pltpu

GROUPS = 8
EPS = 1e-5  # nn.GroupNorm default


def attention_block_kernel(x_hbm, gamma_ref, beta_ref, gavg_ref,
                           wqkv_ref, bqkv_ref, wproj_ref, bproj_ref,
                           o_ref,
                           x_sc, q_sc, k_sc, kT_sc, v_sc, dma_sem):
    bi = pl.program_id(0)
    qi = pl.program_id(1)
    HW, CP = q_sc.shape
    TQ = o_ref.shape[1]
    n_chunks = HW // TQ  # static

    # ---------------- per-batch prologue: x DMA, GroupNorm, fused qkv ----------------
    @pl.when(qi == 0)
    def _():
        # One HBM->VMEM copy of this batch's activations.  Single-buffered on purpose:
        # the slab only changes per batch, so a double-buffered BlockSpec would waste
        # HW*CP*4 bytes of VMEM for a ~us-scale exposed DMA.
        cp_x = pltpu.make_async_copy(x_hbm.at[bi], x_sc, dma_sem)
        cp_x.start()
        cp_x.wait()

        inv_hw = jnp.float32(1.0 / HW)

        # Pass 1 (chunked): per-channel sums -> per-group mean (group averaging via a
        # tiny precomputed (CP, CP) matrix; padded channels average to zero).
        def _sum_body(ci, acc):
            r0 = pl.multiple_of(ci * TQ, TQ)
            xc = x_sc[pl.ds(r0, TQ), :].astype(jnp.float32)
            return acc + jnp.sum(xc, axis=0, keepdims=True)
        ch_sum = lax.fori_loop(0, n_chunks, _sum_body,
                               jnp.zeros((1, CP), jnp.float32))
        g_mean = jnp.dot(ch_sum * inv_hw, gavg_ref[...],
                         preferred_element_type=jnp.float32)          # (1, CP)

        # Pass 2 (chunked): centered sum of squares -> per-group rstd.  Two-pass
        # (centered) variance matches PyTorch's GroupNorm better than E[x^2]-E[x]^2.
        def _ss_body(ci, acc):
            r0 = pl.multiple_of(ci * TQ, TQ)
            xc = x_sc[pl.ds(r0, TQ), :].astype(jnp.float32) - g_mean
            return acc + jnp.sum(xc * xc, axis=0, keepdims=True)
        ch_ss = lax.fori_loop(0, n_chunks, _ss_body,
                              jnp.zeros((1, CP), jnp.float32))
        g_var = jnp.dot(ch_ss * inv_hw, gavg_ref[...],
                        preferred_element_type=jnp.float32)           # (1, CP)
        g_scale = lax.rsqrt(g_var + jnp.float32(EPS)) * gamma_ref[...]
        g_shift = beta_ref[...] - g_mean * g_scale

        # Pass 3 (chunked): normalize + one fused qkv matmul per chunk, results cast
        # and stored straight into bf16 scratch (1/sqrt(C) is folded into the q part
        # of the fused weight by the wrapper).  Keeps the prologue peak at O(TQ*CP).
        def _qkv_body(ci, carry):
            r0 = pl.multiple_of(ci * TQ, TQ)
            xc = x_sc[pl.ds(r0, TQ), :].astype(jnp.float32)
            xn = (xc * g_scale + g_shift).astype(jnp.bfloat16)
            qkv = jnp.dot(xn, wqkv_ref[...],
                          preferred_element_type=jnp.float32) + bqkv_ref[...]
            q_sc[pl.ds(r0, TQ), :] = qkv[:, 0:CP].astype(jnp.bfloat16)
            k_sc[pl.ds(r0, TQ), :] = qkv[:, CP:2 * CP].astype(jnp.bfloat16)
            v_sc[pl.ds(r0, TQ), :] = qkv[:, 2 * CP:3 * CP].astype(jnp.bfloat16)
            return carry
        lax.fori_loop(0, n_chunks, _qkv_body, 0)

        # Transpose k once per batch into (CP, HW) so the hot loop's score matmul is a
        # plain NN dot (no per-tile relayout of k).  Static 128-lane-aligned chunks keep
        # vreg pressure bounded; non-128-multiple HW falls back to one shot.
        tcols = 128 if HW % 128 == 0 else HW
        for j0 in range(0, HW, tcols):
            kT_sc[:, j0:j0 + tcols] = k_sc[j0:j0 + tcols, :].T

    # ---------------- attention for this q tile ----------------
    r0 = pl.multiple_of(qi * TQ, TQ)
    q_t = q_sc[pl.ds(r0, TQ), :]                                       # (TQ, CP) bf16

    s = jnp.dot(q_t, kT_sc[...], preferred_element_type=jnp.float32)   # (TQ, HW) f32
    m = jnp.max(s, axis=-1, keepdims=True)
    p = jnp.exp(s - m)                              # f32 for an accurate row-sum ...
    l = jnp.sum(p, axis=-1, keepdims=True)
    out = jnp.dot(p.astype(jnp.bfloat16), v_sc[...],   # ... bf16 strip into the MXU
                  preferred_element_type=jnp.float32)                  # (TQ, CP)
    out = out / l                                   # exact softmax normalization

    # proj (1x1 conv) + residual; output block is lane-dense (CP multiple of 128).
    out = jnp.dot(out.astype(jnp.bfloat16), wproj_ref[...],
                  preferred_element_type=jnp.float32) + bproj_ref[...]
    x_t = x_sc[pl.ds(r0, TQ), :].astype(jnp.float32)
    o_ref[0] = (x_t + out).astype(o_ref.dtype)


def _vmem_capacity_bytes():
    try:
        return int(pltpu.get_tpu_info().vmem_capacity_bytes)
    except Exception:
        return 64 * 1024 * 1024  # conservative (v7x-class per-core VMEM)


def _pick_q_tile(hw, cap):
    """Largest multiple-of-8 divisor of hw that is <= cap; fall back to full hw."""
    for t in range(min(cap, hw), 7, -1):
        if hw % t == 0 and t % 8 == 0:
            return t
    return hw


def attention_block(x_nchw, params):
    b, c, h, w = x_nchw.shape
    assert c % GROUPS == 0, "GroupNorm(8, C) requires C % 8 == 0"
    hw = h * w
    cg = c // GROUPS
    cp = ((c + 127) // 128) * 128          # lane-pad channels to a multiple of 128
    f32 = jnp.float32

    vmem_cap = _vmem_capacity_bytes()
    tq_cap = 512 if vmem_cap >= 96 * 2**20 else 128   # big tiles on 128 MiB chips
    tq = _pick_q_tile(hw, tq_cap)
    nq = hw // tq

    # NCHW -> (B, HW, C) channels-last, zero-padded channels.
    x_seq = jnp.transpose(x_nchw, (0, 2, 3, 1)).reshape(b, hw, c)
    if cp != c:
        x_seq = jnp.pad(x_seq, ((0, 0), (0, 0), (0, cp - c)))

    # GroupNorm affine params (padded channels get gamma=0 / beta=0 -> normalize to 0).
    gamma = jnp.zeros((1, cp), f32).at[0, :c].set(params["gamma"].reshape(c).astype(f32))
    beta = jnp.zeros((1, cp), f32).at[0, :c].set(params["beta"].reshape(c).astype(f32))

    # Group-averaging matrix: gavg[i, j] = 1/cg if real channels i, j share a group.
    gidx = jnp.arange(c) // cg
    gavg_core = (gidx[:, None] == gidx[None, :]).astype(f32) / f32(cg)
    gavg = jnp.zeros((cp, cp), f32).at[:c, :c].set(gavg_core)

    # Fused qkv weight (C, 3C), transposed for y = x @ W^T, bf16 for the MXU;
    # 1/sqrt(C) (real C) folded into the q slice of the weight and bias.
    scale = 1.0 / math.sqrt(c)
    wqkv = params["wqkv"].reshape(3 * c, c).astype(f32)
    bqkv = params["bqkv"].reshape(3 * c).astype(f32)
    wf = jnp.zeros((cp, 3 * cp), f32)
    wf = wf.at[:c, 0:c].set(wqkv[0:c].T * scale)
    wf = wf.at[:c, cp:cp + c].set(wqkv[c:2 * c].T)
    wf = wf.at[:c, 2 * cp:2 * cp + c].set(wqkv[2 * c:3 * c].T)
    wf = wf.astype(jnp.bfloat16)
    bf = jnp.zeros((1, 3 * cp), f32)
    bf = bf.at[0, 0:c].set(bqkv[0:c] * scale)
    bf = bf.at[0, cp:cp + c].set(bqkv[c:2 * c])
    bf = bf.at[0, 2 * cp:2 * cp + c].set(bqkv[2 * c:3 * c])

    wproj = jnp.zeros((cp, cp), f32).at[:c, :c].set(
        params["wproj"].reshape(c, c).astype(f32).T).astype(jnp.bfloat16)
    bproj = jnp.zeros((1, cp), f32).at[0, :c].set(params["bproj"].reshape(c).astype(f32))

    def _const(shape):
        return pl.BlockSpec(shape, lambda bi, qi, _n=len(shape): (0,) * _n)

    # VMEM budget: resident x (single-buffered), bf16 q/k/kT/v scratch, softmax strip,
    # double-buffered output tile, prologue chunk temporaries, double-buffered constants.
    xbytes = x_seq.dtype.itemsize
    est = (hw * cp * xbytes
           + 4 * hw * cp * 2
           + tq * hw * (4 + 4 + 2)
           + 2 * tq * cp * xbytes
           + tq * 4 * cp * (4 + 2)
           + 2 * (cp * 3 * cp * 2 + cp * cp * 2 + cp * cp * 4 + 16 * cp * 4))
    vmem_limit = int(min(max(int(1.5 * est), 32 * 2**20), int(0.75 * vmem_cap)))

    grid_spec = pltpu.PrefetchScalarGridSpec(
        num_scalar_prefetch=0,
        grid=(b, nq),
        in_specs=[
            pl.BlockSpec(memory_space=pl.ANY),   # x stays in HBM; manual per-batch DMA
            _const((1, cp)),                     # gamma
            _const((1, cp)),                     # beta
            _const((cp, cp)),                    # group-average matrix
            _const((cp, 3 * cp)),                # fused Wqkv^T (bf16, q pre-scaled)
            _const((1, 3 * cp)),                 # fused qkv bias
            _const((cp, cp)),                    # Wproj^T (bf16)
            _const((1, cp)),                     # bproj
        ],
        out_specs=pl.BlockSpec((1, tq, cp), lambda bi, qi: (bi, qi, 0)),
        scratch_shapes=[
            pltpu.VMEM((hw, cp), x_seq.dtype),   # per-batch resident x (single-buffered)
            pltpu.VMEM((hw, cp), jnp.bfloat16),  # q (1/sqrt(C) folded in)
            pltpu.VMEM((hw, cp), jnp.bfloat16),  # k (prologue temp)
            pltpu.VMEM((cp, hw), jnp.bfloat16),  # k^T (used by every q tile)
            pltpu.VMEM((hw, cp), jnp.bfloat16),  # v
            pltpu.SemaphoreType.DMA,             # x copy completion
        ],
    )

    out_seq = pl.pallas_call(
        attention_block_kernel,
        out_shape=jax.ShapeDtypeStruct((b, hw, cp), x_seq.dtype),
        grid_spec=grid_spec,
        compiler_params=pltpu.CompilerParams(
            dimension_semantics=("parallel", "arbitrary"),
            vmem_limit_bytes=vmem_limit,
        ),
    )(x_seq, gamma, beta, gavg, wf, bf, wproj, bproj)

    out_seq = out_seq[:, :, :c]
    return jnp.transpose(out_seq.reshape(b, h, w, c), (0, 3, 1, 2)).astype(x_nchw.dtype)


def _reference(x, params):
    """Pure-JAX f32 reference matching the PyTorch module."""
    b, c, h, w = x.shape
    cg = c // GROUPS
    xg = x.reshape(b, GROUPS, cg, h, w)
    mean = xg.mean(axis=(2, 3, 4), keepdims=True)
    var = ((xg - mean) ** 2).mean(axis=(2, 3, 4), keepdims=True)
    xn = ((xg - mean) / jnp.sqrt(var + EPS)).reshape(b, c, h, w)
    xn = xn * params["gamma"].reshape(1, c, 1, 1) + params["beta"].reshape(1, c, 1, 1)
    wqkv = params["wqkv"].reshape(3 * c, c)
    qkv = jnp.einsum("bchw,oc->bohw", xn, wqkv) + params["bqkv"].reshape(1, 3 * c, 1, 1)
    q, k, v = jnp.split(qkv, 3, axis=1)
    q = q.reshape(b, c, h * w).transpose(0, 2, 1)
    k = k.reshape(b, c, h * w).transpose(0, 2, 1)
    v = v.reshape(b, c, h * w).transpose(0, 2, 1)
    attn = jax.nn.softmax(jnp.einsum("bqc,bkc->bqk", q, k) / math.sqrt(c), axis=-1)
    out = jnp.einsum("bqk,bkc->bqc", attn, v).transpose(0, 2, 1).reshape(b, c, h, w)
    wproj = params["wproj"].reshape(c, c)
    out = jnp.einsum("bchw,oc->bohw", out, wproj) + params["bproj"].reshape(1, c, 1, 1)
    return x + out


if __name__ == "__main__":
    key = jax.random.PRNGKey(0)
    B, C, H, W = 2, 16, 8, 8
    k1, k2, k3, k4, k5 = jax.random.split(key, 5)

    x = jax.random.normal(k1, (B, C, H, W), jnp.float32)
    params = {
        # GroupNorm affine params (PyTorch default init: weight=1, bias=0)
        "gamma": jnp.ones((C,), jnp.float32),
        "beta": jnp.zeros((C,), jnp.float32),
        # Conv2d(C, 3C, 1) weight (3C, C, 1, 1) + bias (3C,)
        "wqkv": jax.random.normal(k2, (3 * C, C, 1, 1), jnp.float32) * 0.1,
        "bqkv": jax.random.normal(k3, (3 * C,), jnp.float32) * 0.01,
        # Conv2d(C, C, 1) weight (C, C, 1, 1) + bias (C,)
        "wproj": jax.random.normal(k4, (C, C, 1, 1), jnp.float32) * 0.1,
        "bproj": jax.random.normal(k5, (C,), jnp.float32) * 0.01,
    }

    y = attention_block(x, params)
    jax.block_until_ready(y)
    assert y.shape == x.shape and y.dtype == x.dtype

    y_ref = _reference(x, params)
    err = float(jnp.max(jnp.abs(y - y_ref)))
    assert err < 5e-2, f"max abs error vs reference: {err}"  # bf16 MXU tolerance
    print("KERNEL_OK")
</pallas_src>

<mosaic_0001>
module attributes {stable_mosaic.version = 11 : i64} {
  func.func @attention_block_kernel(%arg0: i32, %arg1: i32, %arg2: memref<2x64x128xf32, #tpu.memory_space<any>>, %arg3: memref<1x128xf32, #tpu.memory_space<vmem>>, %arg4: memref<1x128xf32, #tpu.memory_space<vmem>>, %arg5: memref<128x128xf32, #tpu.memory_space<vmem>>, %arg6: memref<128x384xbf16, #tpu.memory_space<vmem>>, %arg7: memref<1x384xf32, #tpu.memory_space<vmem>>, %arg8: memref<128x128xbf16, #tpu.memory_space<vmem>>, %arg9: memref<1x128xf32, #tpu.memory_space<vmem>>, %arg10: memref<1x64x128xf32, #tpu.memory_space<vmem>>, %arg11: memref<64x128xf32, #tpu.memory_space<vmem>>, %arg12: memref<64x128xbf16, #tpu.memory_space<vmem>>, %arg13: memref<64x128xbf16, #tpu.memory_space<vmem>>, %arg14: memref<128x64xbf16, #tpu.memory_space<vmem>>, %arg15: memref<64x128xbf16, #tpu.memory_space<vmem>>, %arg16: memref<!tpu.dma_semaphore, #tpu.memory_space<semaphore_mem>>) attributes {dimension_semantics = [#tpu.dimension_semantics<parallel>, #tpu.dimension_semantics<arbitrary>], iteration_bounds = array<i64: 2, 1>, scalar_prefetch = 0 : i64, scratch_operands = 6 : i64, tpu.core_type = #tpu.core_type<tc>, window_params = [{}, {pipeline_mode = #tpu.pipeline_mode<synchronous>, transform_indices = @transform_1, window_bounds = array<i64: 1, 128>}, {pipeline_mode = #tpu.pipeline_mode<synchronous>, transform_indices = @transform_2, window_bounds = array<i64: 1, 128>}, {pipeline_mode = #tpu.pipeline_mode<synchronous>, transform_indices = @transform_3, window_bounds = array<i64: 128, 128>}, {pipeline_mode = #tpu.pipeline_mode<synchronous>, transform_indices = @transform_4, window_bounds = array<i64: 128, 384>}, {pipeline_mode = #tpu.pipeline_mode<synchronous>, transform_indices = @transform_5, window_bounds = array<i64: 1, 384>}, {pipeline_mode = #tpu.pipeline_mode<synchronous>, transform_indices = @transform_6, window_bounds = array<i64: 128, 128>}, {pipeline_mode = #tpu.pipeline_mode<synchronous>, transform_indices = @transform_7, window_bounds = array<i64: 1, 128>}, {transform_indices = @transform_8, window_bounds = array<i64: 1, 64, 128>}]} {
    %c0_i32 = arith.constant 0 : i32
    %0 = arith.cmpi eq, %arg1, %c0_i32 : i32
    %1 = arith.extui %0 : i1 to i32
    %c0_i32_0 = arith.constant 0 : i32
    %2 = arith.cmpi ne, %1, %c0_i32_0 : i32
    scf.if %2 {
      %c0_i32_17 = arith.constant 0 : i32
      %c0_i32_18 = arith.constant 0 : i32
      %33 = tpu.memref_slice %arg2[%arg0, %c0_i32_17, %c0_i32_18] : memref<2x64x128xf32, #tpu.memory_space<any>> -> memref<1x64x128xf32, #tpu.memory_space<any>>
      %34 = tpu.memref_squeeze %33 : memref<1x64x128xf32, #tpu.memory_space<any>> -> memref<64x128xf32, #tpu.memory_space<any>>
      tpu.enqueue_dma source(%34 : memref<64x128xf32, #tpu.memory_space<any>>) target(%arg11 : memref<64x128xf32, #tpu.memory_space<vmem>>) target_semaphore(%arg16 : memref<!tpu.dma_semaphore, #tpu.memory_space<semaphore_mem>>)
      %c0_i32_19 = arith.constant 0 : i32
      %c0_i32_20 = arith.constant 0 : i32
      %35 = tpu.memref_slice %arg2[%arg0, %c0_i32_19, %c0_i32_20] : memref<2x64x128xf32, #tpu.memory_space<any>> -> memref<1x64x128xf32, #tpu.memory_space<any>>
      %36 = tpu.memref_squeeze %35 : memref<1x64x128xf32, #tpu.memory_space<any>> -> memref<64x128xf32, #tpu.memory_space<any>>
      tpu.wait_dma2 semaphore(%arg16 : memref<!tpu.dma_semaphore, #tpu.memory_space<semaphore_mem>>) src(%36 : memref<64x128xf32, #tpu.memory_space<any>>) dst(%arg11 : memref<64x128xf32, #tpu.memory_space<vmem>>)
      %cst_21 = arith.constant 0.000000e+00 : f32
      %37 = vector.broadcast %cst_21 : f32 to vector<1x128xf32>
      %c0_i32_22 = arith.constant 0 : i32
      %c64_i32_23 = arith.constant 64 : i32
      %38 = arith.muli %c0_i32_22, %c64_i32_23 : i32
      %39 = tpu.assume_multiple %38, 64 : i32
      %40 = arith.index_cast %39 : i32 to index
      %c0_24 = arith.constant 0 : index
      %41 = vector.load %arg11[%40, %c0_24] : memref<64x128xf32, #tpu.memory_space<vmem>>, vector<64x128xf32>
      %cst_25 = arith.constant dense<0.000000e+00> : vector<128xf32>
      %42 = vector.multi_reduction <add>, %41, %cst_25 [0] : vector<64x128xf32> to vector<128xf32>
      %43 = vector.shape_cast %42 : vector<128xf32> to vector<1x128xf32>
      %44 = arith.addf %37, %43 : vector<1x128xf32>
      %c1_i32 = arith.constant 1 : i32
      %cst_26 = arith.constant 1.562500e-02 : f32
      %45 = vector.broadcast %cst_26 : f32 to vector<1x128xf32>
      %46 = arith.mulf %44, %45 : vector<1x128xf32>
      %c0_27 = arith.constant 0 : index
      %c0_28 = arith.constant 0 : index
      %47 = vector.load %arg5[%c0_27, %c0_28] : memref<128x128xf32, #tpu.memory_space<vmem>>, vector<128x128xf32>
      %cst_29 = arith.constant dense<0.000000e+00> : vector<1x128xf32>
      %48 = tpu.matmul %46, %47, %cst_29 {dimension_numbers = #tpu.dot_dimension_numbers<[1], [0], [0], [1], [0, 0, 1, 1], [], []>} : vector<1x128xf32>, vector<128x128xf32>, vector<1x128xf32> -> vector<1x128xf32>
      %cst_30 = arith.constant 0.000000e+00 : f32
      %49 = vector.broadcast %cst_30 : f32 to vector<1x128xf32>
      %c0_i32_31 = arith.constant 0 : i32
      %c64_i32_32 = arith.constant 64 : i32
      %50 = arith.muli %c0_i32_31, %c64_i32_32 : i32
      %51 = tpu.assume_multiple %50, 64 : i32
      %52 = arith.index_cast %51 : i32 to index
      %c0_33 = arith.constant 0 : index
      %53 = vector.load %arg11[%52, %c0_33] : memref<64x128xf32, #tpu.memory_space<vmem>>, vector<64x128xf32>
      %54 = vector.broadcast %48 : vector<1x128xf32> to vector<64x128xf32>
      %55 = arith.subf %53, %54 : vector<64x128xf32>
      %56 = arith.mulf %55, %55 : vector<64x128xf32>
      %cst_34 = arith.constant dense<0.000000e+00> : vector<128xf32>
      %57 = vector.multi_reduction <add>, %56, %cst_34 [0] : vector<64x128xf32> to vector<128xf32>
      %58 = vector.shape_cast %57 : vector<128xf32> to vector<1x128xf32>
      %59 = arith.addf %49, %58 : vector<1x128xf32>
      %c1_i32_35 = arith.constant 1 : i32
      %cst_36 = arith.constant 1.562500e-02 : f32
      %60 = vector.broadcast %cst_36 : f32 to vector<1x128xf32>
      %61 = arith.mulf %59, %60 : vector<1x128xf32>
      %c0_37 = arith.constant 0 : index
      %c0_38 = arith.constant 0 : index
      %62 = vector.load %arg5[%c0_37, %c0_38] : memref<128x128xf32, #tpu.memory_space<vmem>>, vector<128x128xf32>
      %cst_39 = arith.constant dense<0.000000e+00> : vector<1x128xf32>
      %63 = tpu.matmul %61, %62, %cst_39 {dimension_numbers = #tpu.dot_dimension_numbers<[1], [0], [0], [1], [0, 0, 1, 1], [], []>} : vector<1x128xf32>, vector<128x128xf32>, vector<1x128xf32> -> vector<1x128xf32>
      %cst_40 = arith.constant 9.99999974E-6 : f32
      %64 = vector.broadcast %cst_40 : f32 to vector<1x128xf32>
      %65 = arith.addf %63, %64 : vector<1x128xf32>
      %66 = math.rsqrt %65 : vector<1x128xf32>
      %c0_41 = arith.constant 0 : index
      %c0_42 = arith.constant 0 : index
      %67 = vector.load %arg3[%c0_41, %c0_42] : memref<1x128xf32, #tpu.memory_space<vmem>>, vector<1x128xf32>
      %68 = arith.mulf %66, %67 : vector<1x128xf32>
      %c0_43 = arith.constant 0 : index
      %c0_44 = arith.constant 0 : index
      %69 = vector.load %arg4[%c0_43, %c0_44] : memref<1x128xf32, #tpu.memory_space<vmem>>, vector<1x128xf32>
      %70 = arith.mulf %48, %68 : vector<1x128xf32>
      %71 = arith.subf %69, %70 : vector<1x128xf32>
      %c0_i32_45 = arith.constant 0 : i32
      %c64_i32_46 = arith.constant 64 : i32
      %72 = arith.muli %c0_i32_45, %c64_i32_46 : i32
      %73 = tpu.assume_multiple %72, 64 : i32
      %74 = arith.index_cast %73 : i32 to index
      %c0_47 = arith.constant 0 : index
      %75 = vector.load %arg11[%74, %c0_47] : memref<64x128xf32, #tpu.memory_space<vmem>>, vector<64x128xf32>
      %76 = vector.broadcast %68 : vector<1x128xf32> to vector<64x128xf32>
      %77 = arith.mulf %75, %76 : vector<64x128xf32>
      %78 = vector.broadcast %71 : vector<1x128xf32> to vector<64x128xf32>
      %79 = arith.addf %77, %78 : vector<64x128xf32>
      %80 = arith.truncf %79 : vector<64x128xf32> to vector<64x128xbf16>
      %c0_48 = arith.constant 0 : index
      %c0_49 = arith.constant 0 : index
      %81 = vector.load %arg6[%c0_48, %c0_49] : memref<128x384xbf16, #tpu.memory_space<vmem>>, vector<128x384xbf16>
      %cst_50 = arith.constant dense<0.000000e+00> : vector<64x384xf32>
      %82 = tpu.matmul %80, %81, %cst_50 {dimension_numbers = #tpu.dot_dimension_numbers<[1], [0], [0], [1], [0, 0, 1, 1], [], []>} : vector<64x128xbf16>, vector<128x384xbf16>, vector<64x384xf32> -> vector<64x384xf32>
      %c0_51 = arith.constant 0 : index
      %c0_52 = arith.constant 0 : index
      %83 = vector.load %arg7[%c0_51, %c0_52] : memref<1x384xf32, #tpu.memory_space<vmem>>, vector<1x384xf32>
      %84 = vector.broadcast %83 : vector<1x384xf32> to vector<64x384xf32>
      %85 = arith.addf %82, %84 : vector<64x384xf32>
      %86 = vector.extract_strided_slice %85 {offsets = [0, 0], sizes = [64, 128], strides = [1, 1]} : vector<64x384xf32> to vector<64x128xf32>
      %87 = arith.truncf %86 : vector<64x128xf32> to vector<64x128xbf16>
      %88 = arith.index_cast %73 : i32 to index
      %c0_53 = arith.constant 0 : index
      %89 = vector.load %arg12[%88, %c0_53] : memref<64x128xbf16, #tpu.memory_space<vmem>>, vector<64x128xbf16>
      tpu.vector_store %arg12[%88, %c0_53], %87 {strides = array<i32>} : memref<64x128xbf16, #tpu.memory_space<vmem>>, vector<64x128xbf16>,
      %90 = vector.extract_strided_slice %85 {offsets = [0, 128], sizes = [64, 128], strides = [1, 1]} : vector<64x384xf32> to vector<64x128xf32>
      %91 = arith.truncf %90 : vector<64x128xf32> to vector<64x128xbf16>
      %92 = arith.index_cast %73 : i32 to index
      %c0_54 = arith.constant 0 : index
      %93 = vector.load %arg13[%92, %c0_54] : memref<64x128xbf16, #tpu.memory_space<vmem>>, vector<64x128xbf16>
      tpu.vector_store %arg13[%92, %c0_54], %91 {strides = array<i32>} : memref<64x128xbf16, #tpu.memory_space<vmem>>, vector<64x128xbf16>,
      %94 = vector.extract_strided_slice %85 {offsets = [0, 256], sizes = [64, 128], strides = [1, 1]} : vector<64x384xf32> to vector<64x128xf32>
      %95 = arith.truncf %94 : vector<64x128xf32> to vector<64x128xbf16>
      %96 = arith.index_cast %73 : i32 to index
      %c0_55 = arith.constant 0 : index
      %97 = vector.load %arg15[%96, %c0_55] : memref<64x128xbf16, #tpu.memory_space<vmem>>, vector<64x128xbf16>
      tpu.vector_store %arg15[%96, %c0_55], %95 {strides = array<i32>} : memref<64x128xbf16, #tpu.memory_space<vmem>>, vector<64x128xbf16>,
      %c1_i32_56 = arith.constant 1 : i32
      %c0_57 = arith.constant 0 : index
      %c0_58 = arith.constant 0 : index
      %98 = vector.load %arg13[%c0_57, %c0_58] : memref<64x128xbf16, #tpu.memory_space<vmem>>, vector<64x128xbf16>
      %99 = tpu.transpose %98, [1, 0] : vector<64x128xbf16> -> vector<128x64xbf16>
      %c0_59 = arith.constant 0 : index
      %c0_60 = arith.constant 0 : index
      %100 = vector.load %arg14[%c0_59, %c0_60] : memref<128x64xbf16, #tpu.memory_space<vmem>>, vector<128x64xbf16>
      tpu.vector_store %arg14[%c0_59, %c0_60], %99 {strides = array<i32>} : memref<128x64xbf16, #tpu.memory_space<vmem>>, vector<128x64xbf16>,
    } else {
    }
    %c64_i32 = arith.constant 64 : i32
    %3 = arith.muli %arg1, %c64_i32 : i32
    %4 = tpu.assume_multiple %3, 64 : i32
    %5 = arith.index_cast %4 : i32 to index
    %c0 = arith.constant 0 : index
    %6 = vector.load %arg12[%5, %c0] : memref<64x128xbf16, #tpu.memory_space<vmem>>, vector<64x128xbf16>
    %c0_1 = arith.constant 0 : index
    %c0_2 = arith.constant 0 : index
    %7 = vector.load %arg14[%c0_1, %c0_2] : memref<128x64xbf16, #tpu.memory_space<vmem>>, vector<128x64xbf16>
    %cst = arith.constant dense<0.000000e+00> : vector<64x64xf32>
    %8 = tpu.matmul %6, %7, %cst {dimension_numbers = #tpu.dot_dimension_numbers<[1], [0], [0], [1], [0, 0, 1, 1], [], []>} : vector<64x128xbf16>, vector<128x64xbf16>, vector<64x64xf32> -> vector<64x64xf32>
    %cst_3 = arith.constant dense<0xFF800000> : vector<64xf32>
    %9 = vector.multi_reduction <maximumf>, %8, %cst_3 [1] : vector<64x64xf32> to vector<64xf32>
    %10 = vector.shape_cast %9 : vector<64xf32> to vector<64x1xf32>
    %11 = vector.broadcast %10 : vector<64x1xf32> to vector<64x64xf32>
    %12 = arith.subf %8, %11 : vector<64x64xf32>
    %13 = math.exp %12 : vector<64x64xf32>
    %cst_4 = arith.constant dense<0.000000e+00> : vector<64xf32>
    %14 = vector.multi_reduction <add>, %13, %cst_4 [1] : vector<64x64xf32> to vector<64xf32>
    %15 = vector.shape_cast %14 : vector<64xf32> to vector<64x1xf32>
    %16 = arith.truncf %13 : vector<64x64xf32> to vector<64x64xbf16>
    %c0_5 = arith.constant 0 : index
    %c0_6 = arith.constant 0 : index
    %17 = vector.load %arg15[%c0_5, %c0_6] : memref<64x128xbf16, #tpu.memory_space<vmem>>, vector<64x128xbf16>
    %cst_7 = arith.constant dense<0.000000e+00> : vector<64x128xf32>
    %18 = tpu.matmul %16, %17, %cst_7 {dimension_numbers = #tpu.dot_dimension_numbers<[1], [0], [0], [1], [0, 0, 1, 1], [], []>} : vector<64x64xbf16>, vector<64x128xbf16>, vector<64x128xf32> -> vector<64x128xf32>
    %19 = vector.broadcast %15 : vector<64x1xf32> to vector<64x128xf32>
    %20 = arith.divf %18, %19 : vector<64x128xf32>
    %21 = arith.truncf %20 : vector<64x128xf32> to vector<64x128xbf16>
    %c0_8 = arith.constant 0 : index
    %c0_9 = arith.constant 0 : index
    %22 = vector.load %arg8[%c0_8, %c0_9] : memref<128x128xbf16, #tpu.memory_space<vmem>>, vector<128x128xbf16>
    %cst_10 = arith.constant dense<0.000000e+00> : vector<64x128xf32>
    %23 = tpu.matmul %21, %22, %cst_10 {dimension_numbers = #tpu.dot_dimension_numbers<[1], [0], [0], [1], [0, 0, 1, 1], [], []>} : vector<64x128xbf16>, vector<128x128xbf16>, vector<64x128xf32> -> vector<64x128xf32>
    %c0_11 = arith.constant 0 : index
    %c0_12 = arith.constant 0 : index
    %24 = vector.load %arg9[%c0_11, %c0_12] : memref<1x128xf32, #tpu.memory_space<vmem>>, vector<1x128xf32>
    %25 = vector.broadcast %24 : vector<1x128xf32> to vector<64x128xf32>
    %26 = arith.addf %23, %25 : vector<64x128xf32>
    %27 = arith.index_cast %4 : i32 to index
    %c0_13 = arith.constant 0 : index
    %28 = vector.load %arg11[%27, %c0_13] : memref<64x128xf32, #tpu.memory_space<vmem>>, vector<64x128xf32>
    %29 = arith.addf %28, %26 : vector<64x128xf32>
    %c0_14 = arith.constant 0 : index
    %c0_15 = arith.constant 0 : index
    %c0_16 = arith.constant 0 : index
    %30 = vector.load %arg10[%c0_14, %c0_15, %c0_16] : memref<1x64x128xf32, #tpu.memory_space<vmem>>, vector<1x64x128xf32>
    %31 = vector.shape_cast %30 : vector<1x64x128xf32> to vector<64x128xf32>
    %32 = vector.shape_cast %29 : vector<64x128xf32> to vector<1x64x128xf32>
    tpu.vector_store %arg10[%c0_14, %c0_15, %c0_16], %32 {strides = array<i32>} : memref<1x64x128xf32, #tpu.memory_space<vmem>>, vector<1x64x128xf32>,
    return
  }
  func.func @transform_1(%arg0: i32, %arg1: i32) -> (i32, i32) {
    %c0_i32 = arith.constant 0 : i32
    %c0_i32_0 = arith.constant 0 : i32
    %c0_i32_1 = arith.constant 0 : i32
    return %c0_i32, %c0_i32_0 : i32, i32
  }
  func.func @transform_2(%arg0: i32, %arg1: i32) -> (i32, i32) {
    %c0_i32 = arith.constant 0 : i32
    %c0_i32_0 = arith.constant 0 : i32
    %c0_i32_1 = arith.constant 0 : i32
    return %c0_i32, %c0_i32_0 : i32, i32
  }
  func.func @transform_3(%arg0: i32, %arg1: i32) -> (i32, i32) {
    %c0_i32 = arith.constant 0 : i32
    %c0_i32_0 = arith.constant 0 : i32
    %c0_i32_1 = arith.constant 0 : i32
    return %c0_i32, %c0_i32_0 : i32, i32
  }
  func.func @transform_4(%arg0: i32, %arg1: i32) -> (i32, i32) {
    %c0_i32 = arith.constant 0 : i32
    %c0_i32_0 = arith.constant 0 : i32
    %c0_i32_1 = arith.constant 0 : i32
    return %c0_i32, %c0_i32_0 : i32, i32
  }
  func.func @transform_5(%arg0: i32, %arg1: i32) -> (i32, i32) {
    %c0_i32 = arith.constant 0 : i32
    %c0_i32_0 = arith.constant 0 : i32
    %c0_i32_1 = arith.constant 0 : i32
    return %c0_i32, %c0_i32_0 : i32, i32
  }
  func.func @transform_6(%arg0: i32, %arg1: i32) -> (i32, i32) {
    %c0_i32 = arith.constant 0 : i32
    %c0_i32_0 = arith.constant 0 : i32
    %c0_i32_1 = arith.constant 0 : i32
    return %c0_i32, %c0_i32_0 : i32, i32
  }
  func.func @transform_7(%arg0: i32, %arg1: i32) -> (i32, i32) {
    %c0_i32 = arith.constant 0 : i32
    %c0_i32_0 = arith.constant 0 : i32
    %c0_i32_1 = arith.constant 0 : i32
    return %c0_i32, %c0_i32_0 : i32, i32
  }
  func.func @transform_8(%arg0: i32, %arg1: i32) -> (i32, i32, i32) {
    %c0_i32 = arith.constant 0 : i32
    %c0_i32_0 = arith.constant 0 : i32
    return %arg0, %arg1, %c0_i32 : i32, i32, i32
  }
}

</mosaic_0001>

<llo_original>
// kernel: tpu_custom_call.1
$region0: #{tpu_custom_call.1}
  #allocation0 [shape = 'u32[]', space=smem, size = 0x4, offset = 0x4, fixed_abs, tag = 'smem constant byte address 0x4 - core index']
  #allocation1 [shape = 'u32[144,128]{1,0:T(1,128)}', space=vmem, size = 0x12000, scoped, tag = 'internal scratch']
  #allocation2 [shape = 'f32[64,128]{1,0:T(8,128)}', space=vmem, size = 0x8000, scoped, tag = 'scratch operand']
  #allocation3 [shape = 'bf16[64,128]{1,0:T(8,128)(2,1)}', space=vmem, size = 0x4000, scoped, tag = 'scratch operand']
  #allocation4 [shape = 'bf16[64,128]{1,0:T(8,128)(2,1)}', space=vmem, size = 0x4000, scoped, tag = 'scratch operand']
  #allocation5 [shape = 'bf16[128,64]{1,0:T(8,128)(2,1)}', space=vmem, size = 0x8000, scoped, tag = 'scratch operand']
  #allocation6 [shape = 'bf16[64,128]{1,0:T(8,128)(2,1)}', space=vmem, size = 0x4000, scoped, tag = 'scratch operand']
  #allocation7 [shape = 's32[1]{0}', space=sflag, size = 0x4, scoped, tag = 'scratch operand']
  #allocation15 [shape = 's32[]', space=sflag, size = 0x4, offset = 0, fixed_abs, tag = 'sflag constant byte address 0x0 - dummy sync flag']
  #allocation16 [shape = 's32[]', space=sflag, size = 0x4, offset = 0, fixed_abs, tag = 'sflag constant byte address 0x0 - dummy sync flag']
  #allocation17 [shape = 'u32[]', space=smem, size = 0x4, offset = 0x44, fixed_abs, tag = 'smem constant byte address 0x44 - assertion arg 0']
  #allocation18 [shape = 'u32[]', space=smem, size = 0x4, offset = 0x48, fixed_abs, tag = 'smem constant byte address 0x48 - assertion arg 1']
  %s0 = inlined_call_operand.hbm [shape: f32[2,64,128], index: 0, kind: input, shape index: {}]
  %s1 = inlined_call_operand.vmem [shape: f32[1,128], index: 1, kind: input, shape index: {}]
  %s2 = inlined_call_operand.vmem [shape: f32[1,128], index: 2, kind: input, shape index: {}]
  %s3 = inlined_call_operand.hbm [shape: f32[128,128], index: 3, kind: input, shape index: {}]
  %s4 = inlined_call_operand.hbm [shape: bf16[128,384], index: 4, kind: input, shape index: {}]
  %s5 = inlined_call_operand.vmem [shape: f32[1,384], index: 5, kind: input, shape index: {}]
  %s6 = inlined_call_operand.hbm [shape: bf16[128,128], index: 6, kind: input, shape index: {}]
  %s7 = inlined_call_operand.vmem [shape: f32[1,128], index: 7, kind: input, shape index: {}]
  %s8 = inlined_call_operand.hbm [shape: f32[2,64,128], index: 8, kind: output, shape index: {}]
  %s9 = sld [smem:[#allocation0]]
  $region81: #{tpu_custom_call.1} parent=0
    _
  %s11 = ssub.s32 1, %s9
  %s12 = scalar_select 0, %s11, %s9
  $region1: #{tpu_custom_call.1} parent=0
    #allocation8 [shape = 'u8[65536]{0}', space=vmem, size = 0x10000, scoped, tag = 'input window, operand 3, single buffered']
    #allocation9 [shape = 's32[2]{0}', space=sflag, size = 0x8, scoped, tag = 'scoped memory for tpu_custom_call.1']
    #allocation10 [shape = 's32[2]{0}', space=sflag, size = 0x8, scoped, tag = 'scoped memory for tpu_custom_call.1']
    #allocation11 [shape = 'u8[98304]{0}', space=vmem, size = 0x18000, scoped, tag = 'input window, operand 4, single buffered']
    #allocation12 [shape = 's32[1]{0}', space=sflag, size = 0x4, scoped, tag = 'scoped memory for tpu_custom_call.1']
    #allocation13 [shape = 'u8[32768]{0}', space=vmem, size = 0x8000, scoped, tag = 'input window, operand 6, single buffered']
    #allocation14 [shape = 'u8[65536]{0}', space=vmem, size = 0x10000, scoped, tag = 'output window, operand 0']
    %13 = vsyncpa [#allocation9], 0
    %14 = vsyncpa [#allocation12], 0
    %15 = vsyncpa [#allocation10], 0
    %s16 = scalar_lea.sflag [#allocation10], 1
    %17 = vsyncpa %s16, 0
    loop: start=0, step=1, limit=4
    $region2: #{tpu_custom_call.1} parent=1 // loop_pre_header
      _
    $region3: #{tpu_custom_call.1} parent=1 // loop_header
      %s19 = sphi 0, %s23
      %p20 = scmp.ge.s32.totalorder %s19, 4
      %s26 = sphi 0, %s38
      %s27 = sphi 0, %s34
      %s28 = sphi 0, %s26
      %s29 = sphi 0, %s27
      %s30 = sphi 0, %s28
      %s31 = sphi 0, %s29
      %s39 = sphi 0, %s39
      %s41 = sphi 0, %s39
      %s42 = sphi 0, %s41
      %s56 = sphi 0, %s42
      %s60 = sphi 0, %s60
      %s62 = sphi 0, %s60
      %s63 = sphi 0, %s62
      %s77 = sphi 0, %s63
      %s81 = sphi 0, %s81
      %s83 = sphi 0, %s81
      %s84 = sphi 0, %s83
      %s98 = sphi 0, %s84
      %s102 = sphi 0, %s102
      %s104 = sphi 0, %s102
      %s105 = sphi 0, %s104
      %s119 = sphi 0, %s105
      %s123 = sphi 0, %s123
      %s125 = sphi 0, %s123
      %s126 = sphi 0, %s125
      %s140 = sphi 0, %s126
      %s144 = sphi 0, %s144
      %s146 = sphi 0, %s144
      %s147 = sphi 0, %s146
      %s161 = sphi 0, %s147
      %s165 = sphi 0, %s165
      %s167 = sphi 0, %s165
      %s168 = sphi 0, %s167
      %s182 = sphi 0, %s168
      %s190 = sphi 0, %s192
      %s193 = sphi 0, %s190
      %s194 = sphi 0, %s193
      %s210 = sphi 0, %s194
    $region4: #{tpu_custom_call.1} parent=1 // loop_header_branch
      %22 = sbr.rel (%p20) target = $region8
    $region5: #{tpu_custom_call.1} parent=1 // loop_body
      %s24 = ssub.s32 %s19, 1
      %s25 = ssub.s32 %s19, 2
      %s32 = sadd.s32 1, %s27
      %p33 = scmp.ge.s32.totalorder %s32, 1
      %s34 = scalar_select %p33, 0, %s32
      %s35 = sadd.s32 1, %s26
      %s36 = scalar_select %p33, %s35, %s26
      %p37 = scmp.ge.s32.totalorder %s36, 2
      %s38 = scalar_select %p37, 0, %s36
      %s40 = sadd.s32 %s39, 1
      %p43 = scmp.eq.s32.totalorder %s19, 1
      %p44 = scmp.ne.s32.totalorder %s39, %s41
      %p45 = scmp.eq.s32.totalorder %s19, 0
      %p46 = por %p44, %p45
      %p47 = scmp.ne.s32.totalorder %s39, %s41
      %p48 = scmp.eq.s32.totalorder %s24, 1
      %p49 = por %p47, %p48
      %p50 = scmp.ne.s32.totalorder %s41, %s42
      %p51 = scmp.eq.s32.totalorder %s24, 0
      %p52 = por %p50, %p51
      %p53 = scmp.ne.s32.totalorder %s41, %s42
      %p54 = scmp.eq.s32.totalorder %s25, 1
      %p55 = por %p53, %p54
      %p57 = scmp.ne.s32.totalorder %s42, %s56
      %p58 = scmp.eq.s32.totalorder %s25, 0
      %p59 = por %p57, %p58
      %s61 = sadd.s32 %s60, 1
      %p64 = scmp.eq.s32.totalorder %s19, 1
      %p65 = scmp.ne.s32.totalorder %s60, %s62
      %p66 = scmp.eq.s32.totalorder %s19, 0
      %p67 = por %p65, %p66
      %p68 = scmp.ne.s32.totalorder %s60, %s62
      %p69 = scmp.eq.s32.totalorder %s24, 1
      %p70 = por %p68, %p69
      %p71 = scmp.ne.s32.totalorder %s62, %s63
      %p72 = scmp.eq.s32.totalorder %s24, 0
      %p73 = por %p71, %p72
      %p74 = scmp.ne.s32.totalorder %s62, %s63
      %p75 = scmp.eq.s32.totalorder %s25, 1
      %p76 = por %p74, %p75
      %p78 = scmp.ne.s32.totalorder %s63, %s77
      %p79 = scmp.eq.s32.totalorder %s25, 0
      %p80 = por %p78, %p79
      %s82 = sadd.s32 %s81, 1
      %p85 = scmp.eq.s32.totalorder %s19, 1
      %p86 = scmp.ne.s32.totalorder %s81, %s83
      %p87 = scmp.eq.s32.totalorder %s19, 0
      %p88 = por %p86, %p87
      %p89 = scmp.ne.s32.totalorder %s81, %s83
      %p90 = scmp.eq.s32.totalorder %s24, 1
      %p91 = por %p89, %p90
      %p92 = scmp.ne.s32.totalorder %s83, %s84
      %p93 = scmp.eq.s32.totalorder %s24, 0
      %p94 = por %p92, %p93
      %p95 = scmp.ne.s32.totalorder %s83, %s84
      %p96 = scmp.eq.s32.totalorder %s25, 1
      %p97 = por %p95, %p96
      %p99 = scmp.ne.s32.totalorder %s84, %s98
      %p100 = scmp.eq.s32.totalorder %s25, 0
      %p101 = por %p99, %p100
      %s103 = sadd.s32 %s102, 1
      %p106 = scmp.eq.s32.totalorder %s19, 1
      %p107 = scmp.ne.s32.totalorder %s102, %s104
      %p108 = scmp.eq.s32.totalorder %s19, 0
      %p109 = por %p107, %p108
      %p110 = scmp.ne.s32.totalorder %s102, %s104
      %p111 = scmp.eq.s32.totalorder %s24, 1
      %p112 = por %p110, %p111
      %p113 = scmp.ne.s32.totalorder %s104, %s105
      %p114 = scmp.eq.s32.totalorder %s24, 0
      %p115 = por %p113, %p114
      %p116 = scmp.ne.s32.totalorder %s104, %s105
      %p117 = scmp.eq.s32.totalorder %s25, 1
      %p118 = por %p116, %p117
      %p120 = scmp.ne.s32.totalorder %s105, %s119
      %p121 = scmp.eq.s32.totalorder %s25, 0
      %p122 = por %p120, %p121
      %s124 = sadd.s32 %s123, 1
      %p127 = scmp.eq.s32.totalorder %s19, 1
      %p128 = scmp.ne.s32.totalorder %s123, %s125
      %p129 = scmp.eq.s32.totalorder %s19, 0
      %p130 = por %p128, %p129
      %p131 = scmp.ne.s32.totalorder %s123, %s125
      %p132 = scmp.eq.s32.totalorder %s24, 1
      %p133 = por %p131, %p132
      %p134 = scmp.ne.s32.totalorder %s125, %s126
      %p135 = scmp.eq.s32.totalorder %s24, 0
      %p136 = por %p134, %p135
      %p137 = scmp.ne.s32.totalorder %s125, %s126
      %p138 = scmp.eq.s32.totalorder %s25, 1
      %p139 = por %p137, %p138
      %p141 = scmp.ne.s32.totalorder %s126, %s140
      %p142 = scmp.eq.s32.totalorder %s25, 0
      %p143 = por %p141, %p142
      %s145 = sadd.s32 %s144, 1
      %p148 = scmp.eq.s32.totalorder %s19, 1
      %p149 = scmp.ne.s32.totalorder %s144, %s146
      %p150 = scmp.eq.s32.totalorder %s19, 0
      %p151 = por %p149, %p150
      %p152 = scmp.ne.s32.totalorder %s144, %s146
      %p153 = scmp.eq.s32.totalorder %s24, 1
      %p154 = por %p152, %p153
      %p155 = scmp.ne.s32.totalorder %s146, %s147
      %p156 = scmp.eq.s32.totalorder %s24, 0
      %p157 = por %p155, %p156
      %p158 = scmp.ne.s32.totalorder %s146, %s147
      %p159 = scmp.eq.s32.totalorder %s25, 1
      %p160 = por %p158, %p159
      %p162 = scmp.ne.s32.totalorder %s147, %s161
      %p163 = scmp.eq.s32.totalorder %s25, 0
      %p164 = por %p162, %p163
      %s166 = sadd.s32 %s165, 1
      %p169 = scmp.eq.s32.totalorder %s19, 1
      %p170 = scmp.ne.s32.totalorder %s165, %s167
      %p171 = scmp.eq.s32.totalorder %s19, 0
      %p172 = por %p170, %p171
      %p173 = scmp.ne.s32.totalorder %s165, %s167
      %p174 = scmp.eq.s32.totalorder %s24, 1
      %p175 = por %p173, %p174
      %p176 = scmp.ne.s32.totalorder %s167, %s168
      %p177 = scmp.eq.s32.totalorder %s24, 0
      %p178 = por %p176, %p177
      %p179 = scmp.ne.s32.totalorder %s167, %s168
      %p180 = scmp.eq.s32.totalorder %s25, 1
      %p181 = por %p179, %p180
      %p183 = scmp.ne.s32.totalorder %s168, %s182
      %p184 = scmp.eq.s32.totalorder %s25, 0
      %p185 = por %p183, %p184
      %s186 = ssub.s32 %s26, %s38
      %s187 = ssub.s32 %s27, %s34
      %s188 = sor.u32 %s186, %s187
      %p189 = scmp.eq.s32.totalorder %s188, 0
      %s191 = sadd.s32 %s190, 1
      %s192 = scalar_select %p189, %s190, %s191
      %p195 = pneg %p189
      %p196 = scmp.eq.s32.totalorder %s19, 1
      %p197 = por %p195, %p196
      %p198 = scmp.ne.s32.totalorder %s190, %s193
      %p199 = scmp.eq.s32.totalorder %s19, 0
      %p200 = por %p198, %p199
      %p201 = scmp.ne.s32.totalorder %s190, %s193
      %p202 = scmp.eq.s32.totalorder %s24, 1
      %p203 = por %p201, %p202
      %p204 = scmp.ne.s32.totalorder %s193, %s194
      %p205 = scmp.eq.s32.totalorder %s24, 0
      %p206 = por %p204, %p205
      %p207 = scmp.ne.s32.totalorder %s193, %s194
      %p208 = scmp.eq.s32.totalorder %s25, 1
      %p209 = por %p207, %p208
      %p211 = scmp.ne.s32.totalorder %s194, %s210
      %p212 = scmp.eq.s32.totalorder %s25, 0
      %p213 = por %p211, %p212
      %p214 = scmp.le.s32.totalorder 1, %s19
      %p215 = scmp.lt.s32.totalorder %s19, 3
      %p216 = pnand %p214, %p215
      %p217 = pneg %p216
      // Predicated region
      $region9: #{tpu_custom_call.1} parent=5 // pred_check
        _
      $region10: #{tpu_custom_call.1} parent=5 // pred_check_branch
        %219 = sbr.rel (%p216) target = $region12
      $region11: #{tpu_custom_call.1} parent=5 // pred_region
        %s220 = ssub.s32 %s19, 1
        // Predicated region
        $region13: #{tpu_custom_call.1} parent=11 // pred_check
          %p221 = pneg %p52
        $region14: #{tpu_custom_call.1} parent=11 // pred_check_branch
          %223 = sbr.rel (%p221) target = $region16
        $region15: #{tpu_custom_call.1} parent=11 // pred_region
          _
        $region16: #{tpu_custom_call.1} parent=11 // pred_fallthru
          _
        // Predicated region
        $region17: #{tpu_custom_call.1} parent=11 // pred_check
          %p224 = pneg %p73
        $region18: #{tpu_custom_call.1} parent=11 // pred_check_branch
          %226 = sbr.rel (%p224) target = $region20
        $region19: #{tpu_custom_call.1} parent=11 // pred_region
          _
        $region20: #{tpu_custom_call.1} parent=11 // pred_fallthru
          _
        // Predicated region
        $region21: #{tpu_custom_call.1} parent=11 // pred_check
          %p227 = pneg %p94
        $region22: #{tpu_custom_call.1} parent=11 // pred_check_branch
          %229 = sbr.rel (%p227) target = $region24
        $region23: #{tpu_custom_call.1} parent=11 // pred_region
          %s231 = ssub.s32 2048, 2048
          %232 = vsyncadd [#allocation9], %s231
          %s233 = sshll.u32 [#allocation8], 4
          %s234 = int_to_ptr.vmem [resolvable:$true] %s233
          %239 = dma.hbm_to_vmem [thread:$0]  %s3, 2048, %s234, [#allocation9], 128, 128, 8
        $region24: #{tpu_custom_call.1} parent=11 // pred_fallthru
          _
        // Predicated region
        $region25: #{tpu_custom_call.1} parent=11 // pred_check
          %p240 = pneg %p115
        $region26: #{tpu_custom_call.1} parent=11 // pred_check_branch
          %242 = sbr.rel (%p240) target = $region28
        $region27: #{tpu_custom_call.1} parent=11 // pred_region
          %s244 = ssub.s32 3072, 3072
          %245 = vsyncadd [#allocation12], %s244
          %s246 = sshll.u32 [#allocation11], 4
          %s247 = int_to_ptr.vmem [resolvable:$true] %s246
          %252 = dma.hbm_to_vmem [thread:$0]  %s4, 3072, %s247, [#allocation12], 192, 192, 12
        $region28: #{tpu_custom_call.1} parent=11 // pred_fallthru
          _
        // Predicated region
        $region29: #{tpu_custom_call.1} parent=11 // pred_check
          %p253 = pneg %p136
        $region30: #{tpu_custom_call.1} parent=11 // pred_check_branch
          %255 = sbr.rel (%p253) target = $region32
        $region31: #{tpu_custom_call.1} parent=11 // pred_region
          _
        $region32: #{tpu_custom_call.1} parent=11 // pred_fallthru
          _
        // Predicated region
        $region33: #{tpu_custom_call.1} parent=11 // pred_check
          %p256 = pneg %p157
        $region34: #{tpu_custom_call.1} parent=11 // pred_check_branch
          %258 = sbr.rel (%p256) target = $region36
        $region35: #{tpu_custom_call.1} parent=11 // pred_region
          %s260 = ssub.s32 1024, 1024
          %261 = vsyncadd [#allocation12], %s260
          %s262 = sshll.u32 [#allocation13], 4
          %s263 = int_to_ptr.vmem [resolvable:$true] %s262
          %268 = dma.hbm_to_vmem [thread:$0]  %s6, 1024, %s263, [#allocation12], 64, 64, 4
        $region36: #{tpu_custom_call.1} parent=11 // pred_fallthru
          _
        // Predicated region
        $region37: #{tpu_custom_call.1} parent=11 // pred_check
          %p269 = pneg %p178
        $region38: #{tpu_custom_call.1} parent=11 // pred_check_branch
          %271 = sbr.rel (%p269) target = $region40
        $region39: #{tpu_custom_call.1} parent=11 // pred_region
          _
        $region40: #{tpu_custom_call.1} parent=11 // pred_fallthru
          _
      $region12: #{tpu_custom_call.1} parent=5 // pred_fallthru
        _
      %p272 = scmp.lt.s32.totalorder %s19, 2
      // Predicated region
      $region41: #{tpu_custom_call.1} parent=5 // pred_check
        %p273 = pneg %p272
      $region42: #{tpu_custom_call.1} parent=5 // pred_check_branch
        %275 = sbr.rel (%p273) target = $region44
      $region43: #{tpu_custom_call.1} parent=5 // pred_region
        _
      $region44: #{tpu_custom_call.1} parent=5 // pred_fallthru
        _
      %p276 = scmp.le.s32.totalorder 1, %s19
      %p277 = scmp.lt.s32.totalorder %s19, 3
      %p278 = pnand %p276, %p277
      %p279 = pneg %p278
      // Predicated region
      $region45: #{tpu_custom_call.1} parent=5 // pred_check
        _
      $region46: #{tpu_custom_call.1} parent=5 // pred_check_branch
        %281 = sbr.rel (%p278) target = $region48
      $region47: #{tpu_custom_call.1} parent=5 // pred_region
        %s282 = ssub.s32 %s19, 1
        // Predicated region
        $region49: #{tpu_custom_call.1} parent=47 // pred_check
          %p283 = pneg %p94
        $region50: #{tpu_custom_call.1} parent=47 // pred_check_branch
          %285 = sbr.rel (%p283) target = $region52
        $region51: #{tpu_custom_call.1} parent=47 // pred_region
          %286 = dma.done [#allocation9], 2048
        $region52: #{tpu_custom_call.1} parent=47 // pred_fallthru
          _
        // Predicated region
        $region53: #{tpu_custom_call.1} parent=47 // pred_check
          %p287 = pneg %p115
        $region54: #{tpu_custom_call.1} parent=47 // pred_check_branch
          %289 = sbr.rel (%p287) target = $region56
        $region55: #{tpu_custom_call.1} parent=47 // pred_region
          %290 = dma.done [#allocation12], 3072
        $region56: #{tpu_custom_call.1} parent=47 // pred_fallthru
          _
        // Predicated region
        $region57: #{tpu_custom_call.1} parent=47 // pred_check
          %p291 = pneg %p157
        $region58: #{tpu_custom_call.1} parent=47 // pred_check_branch
          %293 = sbr.rel (%p291) target = $region60
        $region59: #{tpu_custom_call.1} parent=47 // pred_region
          %294 = dma.done [#allocation12], 1024
        $region60: #{tpu_custom_call.1} parent=47 // pred_fallthru
          _
        %p295 = pneg %p52
        %p296 = pneg %p49
        %p297 = pneg %p73
        %p298 = pneg %p70
        %p299 = pneg %p94
        %p300 = pneg %p91
        %p301 = pneg %p115
        %p302 = pneg %p112
        %p303 = pneg %p136
        %p304 = pneg %p133
        %p305 = pneg %p157
        %p306 = pneg %p154
        %p307 = pneg %p178
        %p308 = pneg %p175
        %p309 = pneg %p206
        %p310 = pneg %p203
        %s311 = sand.u32 %s193, 1
        %s312 = scalar_lea.sflag [#allocation10], %s311
        %s313 = sand.u32 %s193, 1
        %s314 = smul.addr %s313, 64
        %s315 = scalar_lea.vmem [#allocation14], %s314
        %s316 = smul.u32 8, %s29
        %p318 = scmp.eq.s32.totalorder %s29, 0
        // Predicated region
        $region61: #{tpu_custom_call.1} parent=47 // pred_check
          %p319 = pneg %p318
        $region62: #{tpu_custom_call.1} parent=47 // pred_check_branch
          %321 = sbr.rel (%p319) target = $region64
        $region63: #{tpu_custom_call.1} parent=47 // pred_region
          %s322 = smul.u32 %s28, 64
          %s323 = smul.addr %s322, 16
          %s324 = scalar_lea.hbm %s0, %s323
          // Predicated region
          $region65: #{tpu_custom_call.1} parent=63 // pred_check
            _
          $region66: #{tpu_custom_call.1} parent=63 // pred_check_branch
            %326 = sbr.rel target = $region68
          $region67: #{tpu_custom_call.1} parent=63 // pred_region
            %327 = sst [smem:[#allocation17]] [#allocation16]
            %328 = sst [smem:[#allocation18]] [#allocation15]
          $region68: #{tpu_custom_call.1} parent=63 // pred_fallthru
            _
          %330 = shalt.err (0)
          %s332 = sshll.u32 [#allocation2], 4
          %s333 = int_to_ptr.vmem [resolvable:$true] %s332
          %335 = dma.hbm_to_vmem [thread:$0]  %s324, 1024, %s333, [#allocation7]
          %s336 = smul.u32 64, 1
          %s337 = sshll.u32 %s336, 4
          %338 = dma.done [#allocation7], %s337
          %v339 = vld [vmem:[#allocation2] sm:$0xff]
          %v340 = vld [vmem:[#allocation2 + $0x8] sm:$0xff]
          %v341 = vld [vmem:[#allocation2 + $0x10] sm:$0xff]
          %v342 = vld [vmem:[#allocation2 + $0x18] sm:$0xff]
          %v343 = vld [vmem:[#allocation2 + $0x20] sm:$0xff]
          %v344 = vld [vmem:[#allocation2 + $0x28] sm:$0xff]
          %v345 = vld [vmem:[#allocation2 + $0x30] sm:$0xff]
          %v346 = vld [vmem:[#allocation2 + $0x38] sm:$0xff]
          %v347 = vadd.f32 %v339, %v340
          %v348 = vadd.f32 %v347, %v341
          %v349 = vadd.f32 %v348, %v342
          %v350 = vadd.f32 %v349, %v343
          %v351 = vadd.f32 %v350, %v344
          %v352 = vadd.f32 %v351, %v345
          %v353 = vadd.f32 %v352, %v346
          %v354 = vrot.slane %v353, 4
          %v355 = vadd.f32 %v353, %v354
          %v356 = vrot.slane %v355, 2
          %v357 = vadd.f32 %v355, %v356
          %v358 = vrot.slane %v357, 1
          %v359 = vadd.f32 %v357, %v358
          %v360 = vadd.f32 %v359, 0.0
          %v361 = vmul.f32 %v360, 0.015625
          %v362 = vld [vmem:[#allocation8] sm:$0xff]
          %v363 = vld [vmem:[#allocation8 + $0x8] sm:$0xff]
          %v364 = vld [vmem:[#allocation8 + $0x10] sm:$0xff]
          %v365 = vld [vmem:[#allocation8 + $0x18] sm:$0xff]
          %v366 = vld [vmem:[#allocation8 + $0x20] sm:$0xff]
          %v367 = vld [vmem:[#allocation8 + $0x28] sm:$0xff]
          %v368 = vld [vmem:[#allocation8 + $0x30] sm:$0xff]
          %v369 = vld [vmem:[#allocation8 + $0x38] sm:$0xff]
          %v370 = vld [vmem:[#allocation8 + $0x40] sm:$0xff]
          %v371 = vld [vmem:[#allocation8 + $0x48] sm:$0xff]
          %v372 = vld [vmem:[#allocation8 + $0x50] sm:$0xff]
          %v373 = vld [vmem:[#allocation8 + $0x58] sm:$0xff]
          %v374 = vld [vmem:[#allocation8 + $0x60] sm:$0xff]
          %v375 = vld [vmem:[#allocation8 + $0x68] sm:$0xff]
          %v376 = vld [vmem:[#allocation8 + $0x70] sm:$0xff]
          %v377 = vld [vmem:[#allocation8 + $0x78] sm:$0xff]
          %378 = vmatprep.subr.mxu0 0.0
          %379 = vmatpush1.msra.mxu0 %v377
          %380 = vmatprep.subr.mxu0 0.0
          %381 = vmatpush1.msra.mxu0 %v376
          %382 = vmatprep.subr.mxu0 0.0
          %383 = vmatpush1.msra.mxu0 %v375
          %384 = vmatprep.subr.mxu0 0.0
          %385 = vmatpush1.msra.mxu0 %v374
          %386 = vmatprep.subr.mxu0 0.0
          %387 = vmatpush1.msra.mxu0 %v373
          %388 = vmatprep.subr.mxu0 0.0
          %389 = vmatpush1.msra.mxu0 %v372
          %390 = vmatprep.subr.mxu0 0.0
          %391 = vmatpush1.msra.mxu0 %v371
          %392 = vmatprep.subr.mxu0 0.0
          %393 = vmatpush1.msra.mxu0 %v370
          %394 = vmatprep.subr.mxu0 0.0
          %395 = vmatpush1.msra.mxu0 %v369
          %396 = vmatprep.subr.mxu0 0.0
          %397 = vmatpush1.msra.mxu0 %v368
          %398 = vmatprep.subr.mxu0 0.0
          %399 = vmatpush1.msra.mxu0 %v367
          %400 = vmatprep.subr.mxu0 0.0
          %401 = vmatpush1.msra.mxu0 %v366
          %402 = vmatprep.subr.mxu0 0.0
          %403 = vmatpush1.msra.mxu0 %v365
          %404 = vmatprep.subr.mxu0 0.0
          %405 = vmatpush1.msra.mxu0 %v364
          %406 = vmatprep.subr.mxu0 0.0
          %407 = vmatpush1.msra.mxu0 %v363
          %408 = vmatprep.subr.mxu0 0.0
          %409 = vmatpush1.msra.mxu0 %v362
          %410 = vmatprep.subr.mxu0 0.0
          %411 = vmatpush2.msra.mxu0 0.0
          %412 = vmatprep.subr.mxu0 0.0
          %413 = vmatpush2.msra.mxu0 0.0
          %414 = vmatprep.subr.mxu0 0.0
          %415 = vmatpush2.msra.mxu0 0.0
          %416 = vmatprep.subr.mxu0 0.0
          %417 = vmatpush2.msra.mxu0 0.0
          %418 = vmatprep.subr.mxu0 0.0
          %419 = vmatpush2.msra.mxu0 0.0
          %420 = vmatprep.subr.mxu0 0.0
          %421 = vmatpush2.msra.mxu0 0.0
          %422 = vmatprep.subr.mxu0 0.0
          %423 = vmatpush2.msra.mxu0 0.0
          %424 = vmatprep.subr.mxu0 0.0
          %425 = vmatpush2.msra.mxu0 0.0
          %426 = vmatprep.subr.mxu0 0.0
          %427 = vmatpush2.msra.mxu0 0.0
          %428 = vmatprep.subr.mxu0 0.0
          %429 = vmatpush2.msra.mxu0 0.0
          %430 = vmatprep.subr.mxu0 0.0
          %431 = vmatpush2.msra.mxu0 0.0
          %432 = vmatprep.subr.mxu0 0.0
          %433 = vmatpush2.msra.mxu0 0.0
          %434 = vmatprep.subr.mxu0 0.0
          %435 = vmatpush2.msra.mxu0 0.0
          %436 = vmatprep.subr.mxu0 0.0
          %437 = vmatpush2.msra.mxu0 0.0
          %438 = vmatprep.subr.mxu0 0.0
          %439 = vmatpush2.msra.mxu0 0.0
          %440 = vmatprep.subr.mxu0 0.0
          %441 = vmatpush2.msra.mxu0 0.0
          %442 = vmatprep.mubr.f32.mxu0 0.0
          %443 = vmatmul.mubr.f32.gmra.mxu0 %v361
          %v444 = vpop.f32.mrf.mxu0
          %v445 = vadd.f32 0.0, %v444
          %v446 = vpop.f32.mrf.mxu0
          %447 = vdwg.mxu0
          %v448 = vlaneseq
          %v449 = vshrl.u32 %v448, 7
          %v450 = vsub.s32 0, %v449
          %v451 = vrot.slane %v445, %v450
          %v452 = vsub.f32 %v339, %v451
          %v453 = vsub.f32 %v340, %v451
          %v454 = vsub.f32 %v341, %v451
          %v455 = vsub.f32 %v342, %v451
          %v456 = vsub.f32 %v343, %v451
          %v457 = vsub.f32 %v344, %v451
          %v458 = vsub.f32 %v345, %v451
          %v459 = vsub.f32 %v346, %v451
          %v460 = vmul.f32 %v452, %v452
          %v461 = vmul.f32 %v453, %v453
          %v462 = vmul.f32 %v454, %v454
          %v463 = vmul.f32 %v455, %v455
          %v464 = vmul.f32 %v456, %v456
          %v465 = vmul.f32 %v457, %v457
          %v466 = vmul.f32 %v458, %v458
          %v467 = vmul.f32 %v459, %v459
          %v468 = vadd.f32 %v460, %v461
          %v469 = vadd.f32 %v468, %v462
          %v470 = vadd.f32 %v469, %v463
          %v471 = vadd.f32 %v470, %v464
          %v472 = vadd.f32 %v471, %v465
          %v473 = vadd.f32 %v472, %v466
          %v474 = vadd.f32 %v473, %v467
          %v475 = vrot.slane %v474, 4
          %v476 = vadd.f32 %v474, %v475
          %v477 = vrot.slane %v476, 2
          %v478 = vadd.f32 %v476, %v477
          %v479 = vrot.slane %v478, 1
          %v480 = vadd.f32 %v478, %v479
          %v481 = vadd.f32 %v480, 0.0
          %v482 = vmul.f32 %v481, 0.015625
          %483 = vmatprep.subr.mxu0 0.0
          %484 = vmatpush1.msra.mxu0 %v377
          %485 = vmatprep.subr.mxu0 0.0
          %486 = vmatpush1.msra.mxu0 %v376
          %487 = vmatprep.subr.mxu0 0.0
          %488 = vmatpush1.msra.mxu0 %v375
          %489 = vmatprep.subr.mxu0 0.0
          %490 = vmatpush1.msra.mxu0 %v374
          %491 = vmatprep.subr.mxu0 0.0
          %492 = vmatpush1.msra.mxu0 %v373
          %493 = vmatprep.subr.mxu0 0.0
          %494 = vmatpush1.msra.mxu0 %v372
          %495 = vmatprep.subr.mxu0 0.0
          %496 = vmatpush1.msra.mxu0 %v371
          %497 = vmatprep.subr.mxu0 0.0
          %498 = vmatpush1.msra.mxu0 %v370
          %499 = vmatprep.subr.mxu0 0.0
          %500 = vmatpush1.msra.mxu0 %v369
          %501 = vmatprep.subr.mxu0 0.0
          %502 = vmatpush1.msra.mxu0 %v368
          %503 = vmatprep.subr.mxu0 0.0
          %504 = vmatpush1.msra.mxu0 %v367
          %505 = vmatprep.subr.mxu0 0.0
          %506 = vmatpush1.msra.mxu0 %v366
          %507 = vmatprep.subr.mxu0 0.0
          %508 = vmatpush1.msra.mxu0 %v365
          %509 = vmatprep.subr.mxu0 0.0
          %510 = vmatpush1.msra.mxu0 %v364
          %511 = vmatprep.subr.mxu0 0.0
          %512 = vmatpush1.msra.mxu0 %v363
          %513 = vmatprep.subr.mxu0 0.0
          %514 = vmatpush1.msra.mxu0 %v362
          %515 = vmatprep.subr.mxu0 0.0
          %516 = vmatpush2.msra.mxu0 0.0
          %517 = vmatprep.subr.mxu0 0.0
          %518 = vmatpush2.msra.mxu0 0.0
          %519 = vmatprep.subr.mxu0 0.0
          %520 = vmatpush2.msra.mxu0 0.0
          %521 = vmatprep.subr.mxu0 0.0
          %522 = vmatpush2.msra.mxu0 0.0
          %523 = vmatprep.subr.mxu0 0.0
          %524 = vmatpush2.msra.mxu0 0.0
          %525 = vmatprep.subr.mxu0 0.0
          %526 = vmatpush2.msra.mxu0 0.0
          %527 = vmatprep.subr.mxu0 0.0
          %528 = vmatpush2.msra.mxu0 0.0
          %529 = vmatprep.subr.mxu0 0.0
          %530 = vmatpush2.msra.mxu0 0.0
          %531 = vmatprep.subr.mxu0 0.0
          %532 = vmatpush2.msra.mxu0 0.0
          %533 = vmatprep.subr.mxu0 0.0
          %534 = vmatpush2.msra.mxu0 0.0
          %535 = vmatprep.subr.mxu0 0.0
          %536 = vmatpush2.msra.mxu0 0.0
          %537 = vmatprep.subr.mxu0 0.0
          %538 = vmatpush2.msra.mxu0 0.0
          %539 = vmatprep.subr.mxu0 0.0
          %540 = vmatpush2.msra.mxu0 0.0
          %541 = vmatprep.subr.mxu0 0.0
          %542 = vmatpush2.msra.mxu0 0.0
          %543 = vmatprep.subr.mxu0 0.0
          %544 = vmatpush2.msra.mxu0 0.0
          %545 = vmatprep.subr.mxu0 0.0
          %546 = vmatpush2.msra.mxu0 0.0
          %547 = vmatprep.mubr.f32.mxu0 0.0
          %548 = vmatmul.mubr.f32.gmra.mxu0 %v482
          %v549 = vpop.f32.mrf.mxu0
          %v550 = vadd.f32 1e-05, %v549
          %v551 = vpop.f32.mrf.mxu0
          %552 = vdwg.mxu0
          %v553 = vrsqrt.pop %v550
          %v554 = vld [vmem:[%s1] sm:$0x1]
          %v555 = vmul.f32 %v553, %v554
          %v556 = vld [vmem:[%s2] sm:$0x1]
          %v557 = vmul.f32 %v445, %v555
          %v558 = vsub.f32 %v556, %v557
          %v559 = vlaneseq
          %v560 = vshrl.u32 %v559, 7
          %v561 = vsub.s32 0, %v560
          %v562 = vrot.slane %v555, %v561
          %v563 = vmul.f32 %v339, %v562
          %v564 = vmul.f32 %v340, %v562
          %v565 = vmul.f32 %v341, %v562
          %v566 = vmul.f32 %v342, %v562
          %v567 = vmul.f32 %v343, %v562
          %v568 = vmul.f32 %v344, %v562
          %v569 = vmul.f32 %v345, %v562
          %v570 = vmul.f32 %v346, %v562
          %v572 = vlaneseq
          %v573 = vshrl.u32 %v572, 7
          %v574 = vsub.s32 0, %v573
          %v575 = vrot.slane %v558, %v574
          %v577 = vadd.f32 %v563, %v575
          %v578 = vadd.f32 %v564, %v575
          %v579 = vadd.f32 %v565, %v575
          %v580 = vadd.f32 %v566, %v575
          %v581 = vadd.f32 %v567, %v575
          %v582 = vadd.f32 %v568, %v575
          %v583 = vadd.f32 %v569, %v575
          %v584 = vadd.f32 %v570, %v575
          %v585 = vpack.c.bf16 %v578, %v577
          %v586 = vpack.c.bf16 %v580, %v579
          %v587 = vpack.c.bf16 %v582, %v581
          %v588 = vpack.c.bf16 %v584, %v583
          %v589 = vld [vmem:[#allocation11] sm:$0xff]
          %v590 = vld [vmem:[#allocation11 + $0x8] sm:$0xf]
          %v591 = vld [vmem:[#allocation11 + $0xc] sm:$0xff]
          %v592 = vld [vmem:[#allocation11 + $0x14] sm:$0xf]
          %v593 = vld [vmem:[#allocation11 + $0x18] sm:$0xff]
          %v594 = vld [vmem:[#allocation11 + $0x20] sm:$0xf]
          %v595 = vld [vmem:[#allocation11 + $0x24] sm:$0xff]
          %v596 = vld [vmem:[#allocation11 + $0x2c] sm:$0xf]
          %v597 = vld [vmem:[#allocation11 + $0x30] sm:$0xff]
          %v598 = vld [vmem:[#allocation11 + $0x38] sm:$0xf]
          %v599 = vld [vmem:[#allocation11 + $0x3c] sm:$0xff]
          %v600 = vld [vmem:[#allocation11 + $0x44] sm:$0xf]
          %v601 = vld [vmem:[#allocation11 + $0x48] sm:$0xff]
          %v602 = vld [vmem:[#allocation11 + $0x50] sm:$0xf]
          %v603 = vld [vmem:[#allocation11 + $0x54] sm:$0xff]
          %v604 = vld [vmem:[#allocation11 + $0x5c] sm:$0xf]
          %v605 = vld [vmem:[#allocation11 + $0x60] sm:$0xff]
          %v606 = vld [vmem:[#allocation11 + $0x68] sm:$0xf]
          %v607 = vld [vmem:[#allocation11 + $0x6c] sm:$0xff]
          %v608 = vld [vmem:[#allocation11 + $0x74] sm:$0xf]
          %v609 = vld [vmem:[#allocation11 + $0x78] sm:$0xff]
          %v610 = vld [vmem:[#allocation11 + $0x80] sm:$0xf]
          %v611 = vld [vmem:[#allocation11 + $0x84] sm:$0xff]
          %v612 = vld [vmem:[#allocation11 + $0x8c] sm:$0xf]
          %v613 = vld [vmem:[#allocation11 + $0x90] sm:$0xff]
          %v614 = vld [vmem:[#allocation11 + $0x98] sm:$0xf]
          %v615 = vld [vmem:[#allocation11 + $0x9c] sm:$0xff]
          %v616 = vld [vmem:[#allocation11 + $0xa4] sm:$0xf]
          %v617 = vld [vmem:[#allocation11 + $0xa8] sm:$0xff]
          %v618 = vld [vmem:[#allocation11 + $0xb0] sm:$0xf]
          %v619 = vld [vmem:[#allocation11 + $0xb4] sm:$0xff]
          %v620 = vld [vmem:[#allocation11 + $0xbc] sm:$0xf]
          %v621 = vld [vmem:[%s5] sm:$0x7]
          %v623 = vlaneseq
          %v624 = vshrl.u32 %v623, 7
          %v625 = vsub.s32 0, %v624
          %v626 = vrot.slane %v621, %v625
          %v627 = vlaneseq
          %v628 = vshrl.u32 %v627, 7
          %v629 = vsub.s32 1, %v628
          %v630 = vrot.slane %v621, %v629
          %v631 = vlaneseq
          %v632 = vshrl.u32 %v631, 7
          %v633 = vsub.s32 2, %v632
          %v634 = vrot.slane %v621, %v633
          %v670 = vunpack.c.l.b16 %v589
          %v671 = vunpack.c.h.b16 %v589
          %v672 = vunpack.c.l.b16 %v590
          %v673 = vunpack.c.l.b16 %v591
          %v674 = vunpack.c.h.b16 %v591
          %v675 = vunpack.c.l.b16 %v592
          %v676 = vunpack.c.l.b16 %v593
          %v677 = vunpack.c.h.b16 %v593
          %v678 = vunpack.c.l.b16 %v594
          %v679 = vunpack.c.l.b16 %v595
          %v680 = vunpack.c.h.b16 %v595
          %v681 = vunpack.c.l.b16 %v596
          %v682 = vunpack.c.l.b16 %v597
          %v683 = vunpack.c.h.b16 %v597
          %v684 = vunpack.c.l.b16 %v598
          %v685 = vunpack.c.l.b16 %v599
          %v686 = vunpack.c.h.b16 %v599
          %v687 = vunpack.c.l.b16 %v600
          %v688 = vunpack.c.l.b16 %v601
          %v689 = vunpack.c.h.b16 %v601
          %v690 = vunpack.c.l.b16 %v602
          %v691 = vunpack.c.l.b16 %v603
          %v692 = vunpack.c.h.b16 %v603
          %v693 = vunpack.c.l.b16 %v604
          %v694 = vunpack.c.l.b16 %v605
          %v695 = vunpack.c.h.b16 %v605
          %v696 = vunpack.c.l.b16 %v606
          %v697 = vunpack.c.l.b16 %v607
          %v698 = vunpack.c.h.b16 %v607
          %v699 = vunpack.c.l.b16 %v608
          %v700 = vunpack.c.l.b16 %v609
          %v701 = vunpack.c.h.b16 %v609
          %v702 = vunpack.c.l.b16 %v610
          %v703 = vunpack.c.l.b16 %v611
          %v704 = vunpack.c.h.b16 %v611
          %v705 = vunpack.c.l.b16 %v612
          %v706 = vunpack.c.l.b16 %v613
          %v707 = vunpack.c.h.b16 %v613
          %v708 = vunpack.c.l.b16 %v614
          %v709 = vunpack.c.l.b16 %v615
          %v710 = vunpack.c.h.b16 %v615
          %v711 = vunpack.c.l.b16 %v616
          %v712 = vunpack.c.l.b16 %v617
          %v713 = vunpack.c.h.b16 %v617
          %v714 = vunpack.c.l.b16 %v618
          %v715 = vunpack.c.l.b16 %v619
          %v716 = vunpack.c.h.b16 %v619
          %v717 = vunpack.c.l.b16 %v620
          %v718 = vpack.c.b16 %v673, %v670
          %v719 = vpack.c.b16 %v674, %v671
          %v720 = vpack.c.b16 %v675, %v672
          %v721 = vpack.c.b16 %v679, %v676
          %v722 = vpack.c.b16 %v680, %v677
          %v723 = vpack.c.b16 %v681, %v678
          %v724 = vpack.c.b16 %v685, %v682
          %v725 = vpack.c.b16 %v686, %v683
          %v726 = vpack.c.b16 %v687, %v684
          %v727 = vpack.c.b16 %v691, %v688
          %v728 = vpack.c.b16 %v692, %v689
          %v729 = vpack.c.b16 %v693, %v690
          %v730 = vpack.c.b16 %v697, %v694
          %v731 = vpack.c.b16 %v698, %v695
          %v732 = vpack.c.b16 %v699, %v696
          %v733 = vpack.c.b16 %v703, %v700
          %v734 = vpack.c.b16 %v704, %v701
          %v735 = vpack.c.b16 %v705, %v702
          %v736 = vpack.c.b16 %v709, %v706
          %v737 = vpack.c.b16 %v710, %v707
          %v738 = vpack.c.b16 %v711, %v708
          %v739 = vpack.c.b16 %v715, %v712
          %v740 = vpack.c.b16 %v716, %v713
          %v741 = vpack.c.b16 %v717, %v714
          %766 = vmatprep.subr.bf16.mxu0 %v740
          %767 = vmatpush1.bf16.msra.mxu0 %v739
          %768 = vmatprep.subr.bf16.mxu0 %v737
          %769 = vmatpush1.bf16.msra.mxu0 %v736
          %770 = vmatprep.subr.bf16.mxu0 %v734
          %771 = vmatpush1.bf16.msra.mxu0 %v733
          %772 = vmatprep.subr.bf16.mxu0 %v731
          %773 = vmatpush1.bf16.msra.mxu0 %v730
          %774 = vmatprep.subr.bf16.mxu0 %v728
          %775 = vmatpush1.bf16.msra.mxu0 %v727
          %776 = vmatprep.subr.bf16.mxu0 %v725
          %777 = vmatpush1.bf16.msra.mxu0 %v724
          %778 = vmatprep.subr.bf16.mxu0 %v722
          %779 = vmatpush1.bf16.msra.mxu0 %v721
          %780 = vmatprep.subr.bf16.mxu0 %v719
          %781 = vmatpush1.bf16.msra.mxu0 %v718
          %782 = vmatprep.subr.bf16.mxu0 0
          %783 = vmatpush2.bf16.msra.mxu0 0
          %784 = vmatprep.subr.bf16.mxu0 0
          %785 = vmatpush2.bf16.msra.mxu0 0
          %786 = vmatprep.subr.bf16.mxu0 0
          %787 = vmatpush2.bf16.msra.mxu0 0
          %788 = vmatprep.subr.bf16.mxu0 0
          %789 = vmatpush2.bf16.msra.mxu0 0
          %790 = vmatprep.subr.bf16.mxu0 0
          %791 = vmatpush2.bf16.msra.mxu0 0
          %792 = vmatprep.subr.bf16.mxu0 0
          %793 = vmatpush2.bf16.msra.mxu0 0
          %794 = vmatprep.subr.bf16.mxu0 0
          %795 = vmatpush2.bf16.msra.mxu0 0
          %796 = vmatprep.subr.bf16.mxu0 0
          %797 = vmatpush2.bf16.msra.mxu0 0
          %798 = vmatprep.mubr.bf16.mxu0 0
          %799 = vmatmul.mubr.bf16.gmra.mxu0 %v585
          %v800 = vpop.f32.mrf.mxu0
          %v801 = vadd.f32 %v626, %v800
          %v802 = vpop.f32.mrf.mxu0
          %v803 = vadd.f32 %v630, %v802
          %v804 = vpop.f32.mrf.mxu0
          %v805 = vadd.f32 %v626, %v804
          %v806 = vpop.f32.mrf.mxu0
          %v807 = vadd.f32 %v630, %v806
          %808 = vmatprep.mubr.bf16.mxu0 0
          %809 = vmatmul.mubr.bf16.gmra.mxu0 %v586
          %v810 = vpop.f32.mrf.mxu0
          %v811 = vadd.f32 %v626, %v810
          %v812 = vpop.f32.mrf.mxu0
          %v813 = vadd.f32 %v630, %v812
          %v814 = vpop.f32.mrf.mxu0
          %v815 = vadd.f32 %v626, %v814
          %v816 = vpop.f32.mrf.mxu0
          %v817 = vadd.f32 %v630, %v816
          %818 = vmatprep.mubr.bf16.mxu0 0
          %819 = vmatmul.mubr.bf16.gmra.mxu0 %v587
          %v820 = vpop.f32.mrf.mxu0
          %v821 = vadd.f32 %v626, %v820
          %v822 = vpop.f32.mrf.mxu0
          %v823 = vadd.f32 %v630, %v822
          %v824 = vpop.f32.mrf.mxu0
          %v825 = vadd.f32 %v626, %v824
          %v826 = vpop.f32.mrf.mxu0
          %v827 = vadd.f32 %v630, %v826
          %828 = vmatprep.mubr.bf16.mxu0 0
          %829 = vmatmul.mubr.bf16.gmra.mxu0 %v588
          %v830 = vpop.f32.mrf.mxu0
          %v831 = vadd.f32 %v626, %v830
          %v832 = vpop.f32.mrf.mxu0
          %v833 = vadd.f32 %v630, %v832
          %v834 = vpop.f32.mrf.mxu0
          %v835 = vadd.f32 %v626, %v834
          %v836 = vpop.f32.mrf.mxu0
          %v837 = vadd.f32 %v630, %v836
          %838 = vdwg.mxu0
          %839 = vmatprep.subr.bf16.mxu0 0
          %840 = vmatpush1.bf16.msra.mxu0 %v741
          %841 = vmatprep.subr.bf16.mxu0 0
          %842 = vmatpush1.bf16.msra.mxu0 %v738
          %843 = vmatprep.subr.bf16.mxu0 0
          %844 = vmatpush1.bf16.msra.mxu0 %v735
          %845 = vmatprep.subr.bf16.mxu0 0
          %846 = vmatpush1.bf16.msra.mxu0 %v732
          %847 = vmatprep.subr.bf16.mxu0 0
          %848 = vmatpush1.bf16.msra.mxu0 %v729
          %849 = vmatprep.subr.bf16.mxu0 0
          %850 = vmatpush1.bf16.msra.mxu0 %v726
          %851 = vmatprep.subr.bf16.mxu0 0
          %852 = vmatpush1.bf16.msra.mxu0 %v723
          %853 = vmatprep.subr.bf16.mxu0 0
          %854 = vmatpush1.bf16.msra.mxu0 %v720
          %855 = vmatprep.subr.bf16.mxu0 0
          %856 = vmatpush2.bf16.msra.mxu0 0
          %857 = vmatprep.subr.bf16.mxu0 0
          %858 = vmatpush2.bf16.msra.mxu0 0
          %859 = vmatprep.subr.bf16.mxu0 0
          %860 = vmatpush2.bf16.msra.mxu0 0
          %861 = vmatprep.subr.bf16.mxu0 0
          %862 = vmatpush2.bf16.msra.mxu0 0
          %863 = vmatprep.subr.bf16.mxu0 0
          %864 = vmatpush2.bf16.msra.mxu0 0
          %865 = vmatprep.subr.bf16.mxu0 0
          %866 = vmatpush2.bf16.msra.mxu0 0
          %867 = vmatprep.subr.bf16.mxu0 0
          %868 = vmatpush2.bf16.msra.mxu0 0
          %869 = vmatprep.subr.bf16.mxu0 0
          %870 = vmatpush2.bf16.msra.mxu0 0
          %871 = vmatprep.mubr.bf16.mxu0 0
          %872 = vmatmul.mubr.bf16.gmra.mxu0 %v585
          %v873 = vpop.f32.mrf.mxu0
          %v874 = vadd.f32 %v634, %v873
          %v875 = vpop.f32.mrf.mxu0
          %v876 = vpop.f32.mrf.mxu0
          %v877 = vadd.f32 %v634, %v876
          %v878 = vpop.f32.mrf.mxu0
          %879 = vmatprep.mubr.bf16.mxu0 0
          %880 = vmatmul.mubr.bf16.gmra.mxu0 %v586
          %v881 = vpop.f32.mrf.mxu0
          %v882 = vadd.f32 %v634, %v881
          %v883 = vpop.f32.mrf.mxu0
          %v884 = vpop.f32.mrf.mxu0
          %v885 = vadd.f32 %v634, %v884
          %v886 = vpop.f32.mrf.mxu0
          %887 = vmatprep.mubr.bf16.mxu0 0
          %888 = vmatmul.mubr.bf16.gmra.mxu0 %v587
          %v889 = vpop.f32.mrf.mxu0
          %v890 = vadd.f32 %v634, %v889
          %v891 = vpop.f32.mrf.mxu0
          %v892 = vpop.f32.mrf.mxu0
          %v893 = vadd.f32 %v634, %v892
          %v894 = vpop.f32.mrf.mxu0
          %895 = vmatprep.mubr.bf16.mxu0 0
          %896 = vmatmul.mubr.bf16.gmra.mxu0 %v588
          %v897 = vpop.f32.mrf.mxu0
          %v898 = vadd.f32 %v634, %v897
          %v899 = vpop.f32.mrf.mxu0
          %v900 = vpop.f32.mrf.mxu0
          %v901 = vadd.f32 %v634, %v900
          %v902 = vpop.f32.mrf.mxu0
          %903 = vdwg.mxu0
          %v904 = vpack.c.bf16 %v805, %v801
          %v905 = vpack.c.bf16 %v815, %v811
          %v906 = vpack.c.bf16 %v825, %v821
          %v907 = vpack.c.bf16 %v835, %v831
          %v912 = vunpack.c.l.b16 %v904
          %v913 = vunpack.c.h.b16 %v904
          %v914 = vunpack.c.l.b16 %v905
          %v915 = vunpack.c.h.b16 %v905
          %v916 = vunpack.c.l.b16 %v906
          %v917 = vunpack.c.h.b16 %v906
          %v918 = vunpack.c.l.b16 %v907
          %v919 = vunpack.c.h.b16 %v907
          %v920 = vpack.c.b16 %v912, %v912
          %v921 = vpack.c.b16 %v913, %v913
          %v922 = vpack.c.b16 %v914, %v914
          %v923 = vpack.c.b16 %v915, %v915
          %v924 = vpack.c.b16 %v916, %v916
          %v925 = vpack.c.b16 %v917, %v917
          %v926 = vpack.c.b16 %v918, %v918
          %v927 = vpack.c.b16 %v919, %v919
          %936 = vst [vmem:[#allocation3] sm:$0xf] %v920
          %937 = vst [vmem:[#allocation3 + $0x4] sm:$0xf] %v921
          %938 = vst [vmem:[#allocation3 + $0x8] sm:$0xf] %v922
          %939 = vst [vmem:[#allocation3 + $0xc] sm:$0xf] %v923
          %940 = vst [vmem:[#allocation3 + $0x10] sm:$0xf] %v924
          %941 = vst [vmem:[#allocation3 + $0x14] sm:$0xf] %v925
          %942 = vst [vmem:[#allocation3 + $0x18] sm:$0xf] %v926
          %943 = vst [vmem:[#allocation3 + $0x1c] sm:$0xf] %v927
          %v944 = vpack.c.bf16 %v807, %v803
          %v945 = vpack.c.bf16 %v817, %v813
          %v946 = vpack.c.bf16 %v827, %v823
          %v947 = vpack.c.bf16 %v837, %v833
          %v952 = vunpack.c.l.b16 %v944
          %v953 = vunpack.c.h.b16 %v944
          %v954 = vunpack.c.l.b16 %v945
          %v955 = vunpack.c.h.b16 %v945
          %v956 = vunpack.c.l.b16 %v946
          %v957 = vunpack.c.h.b16 %v946
          %v958 = vunpack.c.l.b16 %v947
          %v959 = vunpack.c.h.b16 %v947
          %v960 = vpack.c.b16 %v952, %v952
          %v961 = vpack.c.b16 %v953, %v953
          %v962 = vpack.c.b16 %v954, %v954
          %v963 = vpack.c.b16 %v955, %v955
          %v964 = vpack.c.b16 %v956, %v956
          %v965 = vpack.c.b16 %v957, %v957
          %v966 = vpack.c.b16 %v958, %v958
          %v967 = vpack.c.b16 %v959, %v959
          %976 = vst [vmem:[#allocation4] sm:$0xf] %v960
          %977 = vst [vmem:[#allocation4 + $0x4] sm:$0xf] %v961
          %978 = vst [vmem:[#allocation4 + $0x8] sm:$0xf] %v962
          %979 = vst [vmem:[#allocation4 + $0xc] sm:$0xf] %v963
          %980 = vst [vmem:[#allocation4 + $0x10] sm:$0xf] %v964
          %981 = vst [vmem:[#allocation4 + $0x14] sm:$0xf] %v965
          %982 = vst [vmem:[#allocation4 + $0x18] sm:$0xf] %v966
          %983 = vst [vmem:[#allocation4 + $0x1c] sm:$0xf] %v967
          %v984 = vpack.c.bf16 %v877, %v874
          %v985 = vpack.c.bf16 %v885, %v882
          %v986 = vpack.c.bf16 %v893, %v890
          %v987 = vpack.c.bf16 %v901, %v898
          %v992 = vunpack.c.l.b16 %v984
          %v993 = vunpack.c.h.b16 %v984
          %v994 = vunpack.c.l.b16 %v985
          %v995 = vunpack.c.h.b16 %v985
          %v996 = vunpack.c.l.b16 %v986
          %v997 = vunpack.c.h.b16 %v986
          %v998 = vunpack.c.l.b16 %v987
          %v999 = vunpack.c.h.b16 %v987
          %v1000 = vpack.c.b16 %v992, %v992
          %v1001 = vpack.c.b16 %v993, %v993
          %v1002 = vpack.c.b16 %v994, %v994
          %v1003 = vpack.c.b16 %v995, %v995
          %v1004 = vpack.c.b16 %v996, %v996
          %v1005 = vpack.c.b16 %v997, %v997
          %v1006 = vpack.c.b16 %v998, %v998
          %v1007 = vpack.c.b16 %v999, %v999
          %1016 = vst [vmem:[#allocation6] sm:$0xf] %v1000
          %1017 = vst [vmem:[#allocation6 + $0x4] sm:$0xf] %v1001
          %1018 = vst [vmem:[#allocation6 + $0x8] sm:$0xf] %v1002
          %1019 = vst [vmem:[#allocation6 + $0xc] sm:$0xf] %v1003
          %1020 = vst [vmem:[#allocation6 + $0x10] sm:$0xf] %v1004
          %1021 = vst [vmem:[#allocation6 + $0x14] sm:$0xf] %v1005
          %1022 = vst [vmem:[#allocation6 + $0x18] sm:$0xf] %v1006
          %1023 = vst [vmem:[#allocation6 + $0x1c] sm:$0xf] %v1007
          %v1024 = vld [vmem:[#allocation4] sm:$0xf]
          %v1025 = vld [vmem:[#allocation4 + $0x4] sm:$0xf]
          %v1026 = vld [vmem:[#allocation4 + $0x8] sm:$0xf]
          %v1027 = vld [vmem:[#allocation4 + $0xc] sm:$0xf]
          %v1028 = vld [vmem:[#allocation4 + $0x10] sm:$0xf]
          %v1029 = vld [vmem:[#allocation4 + $0x14] sm:$0xf]
          %v1030 = vld [vmem:[#allocation4 + $0x18] sm:$0xf]
          %v1031 = vld [vmem:[#allocation4 + $0x1c] sm:$0xf]
          %v1040 = vunpack.c.l.b16 %v1024
          %v1041 = vunpack.c.l.b16 %v1025
          %v1042 = vunpack.c.l.b16 %v1026
          %v1043 = vunpack.c.l.b16 %v1027
          %v1044 = vunpack.c.l.b16 %v1028
          %v1045 = vunpack.c.l.b16 %v1029
          %v1046 = vunpack.c.l.b16 %v1030
          %v1047 = vunpack.c.l.b16 %v1031
          %v1048 = vpack.c.b16 %v1041, %v1040
          %v1049 = vpack.c.b16 %v1043, %v1042
          %v1050 = vpack.c.b16 %v1045, %v1044
          %v1051 = vpack.c.b16 %v1047, %v1046
          %1056 = vxpose.xlu0.c.b16.start [1/8] %v1048, 128
          %1057 = vxpose.xlu0.c.b16.cont [2/8] %v1049, 128
          %1058 = vxpose.xlu0.c.b16.cont [3/8] %v1050, 128
          %1059 = vxpose.xlu0.c.b16.cont [4/8] %v1051, 128
          %1060 = vxpose.xlu0.c.b16.cont [5/8] 0, 128
          %1061 = vxpose.xlu0.c.b16.cont [6/8] 0, 128
          %1062 = vxpose.xlu0.c.b16.cont [7/8] 0, 128
          %1063 = vxpose.xlu0.c.b16.end [8/8] 0, 128
          %v1064 = vpop.trf.xlu0
          %v1065 = vpop.trf.xlu0
          %v1066 = vpop.trf.xlu0
          %v1067 = vpop.trf.xlu0
          %v1068 = vpop.trf.xlu0
          %v1069 = vpop.trf.xlu0
          %v1070 = vpop.trf.xlu0
          %v1071 = vpop.trf.xlu0
          %v1080 = vunpack.c.l.b16 %v1064
          %v1081 = vunpack.c.h.b16 %v1064
          %v1082 = vunpack.c.l.b16 %v1065
          %v1083 = vunpack.c.h.b16 %v1065
          %v1084 = vunpack.c.l.b16 %v1066
          %v1085 = vunpack.c.h.b16 %v1066
          %v1086 = vunpack.c.l.b16 %v1067
          %v1087 = vunpack.c.h.b16 %v1067
          %v1088 = vunpack.c.l.b16 %v1068
          %v1089 = vunpack.c.h.b16 %v1068
          %v1090 = vunpack.c.l.b16 %v1069
          %v1091 = vunpack.c.h.b16 %v1069
          %v1092 = vunpack.c.l.b16 %v1070
          %v1093 = vunpack.c.h.b16 %v1070
          %v1094 = vunpack.c.l.b16 %v1071
          %v1095 = vunpack.c.h.b16 %v1071
          %v1096 = vpack.c.b16 %v1080, %v1080
          %v1097 = vpack.c.b16 %v1081, %v1081
          %v1098 = vpack.c.b16 %v1082, %v1082
          %v1099 = vpack.c.b16 %v1083, %v1083
          %v1100 = vpack.c.b16 %v1084, %v1084
          %v1101 = vpack.c.b16 %v1085, %v1085
          %v1102 = vpack.c.b16 %v1086, %v1086
          %v1103 = vpack.c.b16 %v1087, %v1087
          %v1104 = vpack.c.b16 %v1088, %v1088
          %v1105 = vpack.c.b16 %v1089, %v1089
          %v1106 = vpack.c.b16 %v1090, %v1090
          %v1107 = vpack.c.b16 %v1091, %v1091
          %v1108 = vpack.c.b16 %v1092, %v1092
          %v1109 = vpack.c.b16 %v1093, %v1093
          %v1110 = vpack.c.b16 %v1094, %v1094
          %v1111 = vpack.c.b16 %v1095, %v1095
          %vm1128 = vcmask 519168
          %1129 = vst.msk [vmem:[#allocation5] sm:$0xf] %vm1128, %v1096
          %1130 = vst.msk [vmem:[#allocation5 + $0x4] sm:$0xf] %vm1128, %v1097
          %1131 = vst.msk [vmem:[#allocation5 + $0x8] sm:$0xf] %vm1128, %v1098
          %1132 = vst.msk [vmem:[#allocation5 + $0xc] sm:$0xf] %vm1128, %v1099
          %1133 = vst.msk [vmem:[#allocation5 + $0x10] sm:$0xf] %vm1128, %v1100
          %1134 = vst.msk [vmem:[#allocation5 + $0x14] sm:$0xf] %vm1128, %v1101
          %1135 = vst.msk [vmem:[#allocation5 + $0x18] sm:$0xf] %vm1128, %v1102
          %1136 = vst.msk [vmem:[#allocation5 + $0x1c] sm:$0xf] %vm1128, %v1103
          %1137 = vst.msk [vmem:[#allocation5 + $0x20] sm:$0xf] %vm1128, %v1104
          %1138 = vst.msk [vmem:[#allocation5 + $0x24] sm:$0xf] %vm1128, %v1105
          %1139 = vst.msk [vmem:[#allocation5 + $0x28] sm:$0xf] %vm1128, %v1106
          %1140 = vst.msk [vmem:[#allocation5 + $0x2c] sm:$0xf] %vm1128, %v1107
          %1141 = vst.msk [vmem:[#allocation5 + $0x30] sm:$0xf] %vm1128, %v1108
          %1142 = vst.msk [vmem:[#allocation5 + $0x34] sm:$0xf] %vm1128, %v1109
          %1143 = vst.msk [vmem:[#allocation5 + $0x38] sm:$0xf] %vm1128, %v1110
          %1144 = vst.msk [vmem:[#allocation5 + $0x3c] sm:$0xf] %vm1128, %v1111
        $region64: #{tpu_custom_call.1} parent=47 // pred_fallthru
          _
        %s1145 = smul.u32 %s29, 64
        %s1146 = sshra.s32 %s1145, 3
        %s1147 = sand.u32 %s1145, 7
        %s1148 = smul.addr %s1146, 4
        %s1149 = scalar_lea.vmem [#allocation3], %s1148
        %v1150 = vld [vmem:[%s1149] sm:$0xf]
        %v1151 = vld [vmem:[%s1149 + $0x4] sm:$0xf]
        %v1152 = vld [vmem:[%s1149 + $0x8] sm:$0xf]
        %v1153 = vld [vmem:[%s1149 + $0xc] sm:$0xf]
        %v1154 = vld [vmem:[%s1149 + $0x10] sm:$0xf]
        %v1155 = vld [vmem:[%s1149 + $0x14] sm:$0xf]
        %v1156 = vld [vmem:[%s1149 + $0x18] sm:$0xf]
        %v1157 = vld [vmem:[%s1149 + $0x1c] sm:$0xf]
        %v1158 = vld [vmem:[#allocation5] sm:$0xf]
        %v1159 = vld [vmem:[#allocation5 + $0x4] sm:$0xf]
        %v1160 = vld [vmem:[#allocation5 + $0x8] sm:$0xf]
        %v1161 = vld [vmem:[#allocation5 + $0xc] sm:$0xf]
        %v1162 = vld [vmem:[#allocation5 + $0x10] sm:$0xf]
        %v1163 = vld [vmem:[#allocation5 + $0x14] sm:$0xf]
        %v1164 = vld [vmem:[#allocation5 + $0x18] sm:$0xf]
        %v1165 = vld [vmem:[#allocation5 + $0x1c] sm:$0xf]
        %v1166 = vld [vmem:[#allocation5 + $0x20] sm:$0xf]
        %v1167 = vld [vmem:[#allocation5 + $0x24] sm:$0xf]
        %v1168 = vld [vmem:[#allocation5 + $0x28] sm:$0xf]
        %v1169 = vld [vmem:[#allocation5 + $0x2c] sm:$0xf]
        %v1170 = vld [vmem:[#allocation5 + $0x30] sm:$0xf]
        %v1171 = vld [vmem:[#allocation5 + $0x34] sm:$0xf]
        %v1172 = vld [vmem:[#allocation5 + $0x38] sm:$0xf]
        %v1173 = vld [vmem:[#allocation5 + $0x3c] sm:$0xf]
        %v1182 = vunpack.c.l.b16 %v1150
        %v1183 = vunpack.c.l.b16 %v1151
        %v1184 = vunpack.c.l.b16 %v1152
        %v1185 = vunpack.c.l.b16 %v1153
        %v1186 = vunpack.c.l.b16 %v1154
        %v1187 = vunpack.c.l.b16 %v1155
        %v1188 = vunpack.c.l.b16 %v1156
        %v1189 = vunpack.c.l.b16 %v1157
        %v1190 = vpack.c.b16 %v1183, %v1182
        %v1191 = vpack.c.b16 %v1185, %v1184
        %v1192 = vpack.c.b16 %v1187, %v1186
        %v1193 = vpack.c.b16 %v1189, %v1188
        %v1214 = vunpack.c.l.b16 %v1158
        %v1215 = vunpack.c.l.b16 %v1159
        %v1216 = vunpack.c.l.b16 %v1160
        %v1217 = vunpack.c.l.b16 %v1161
        %v1218 = vunpack.c.l.b16 %v1162
        %v1219 = vunpack.c.l.b16 %v1163
        %v1220 = vunpack.c.l.b16 %v1164
        %v1221 = vunpack.c.l.b16 %v1165
        %v1222 = vunpack.c.l.b16 %v1166
        %v1223 = vunpack.c.l.b16 %v1167
        %v1224 = vunpack.c.l.b16 %v1168
        %v1225 = vunpack.c.l.b16 %v1169
        %v1226 = vunpack.c.l.b16 %v1170
        %v1227 = vunpack.c.l.b16 %v1171
        %v1228 = vunpack.c.l.b16 %v1172
        %v1229 = vunpack.c.l.b16 %v1173
        %v1230 = vpack.c.b16 %v1215, %v1214
        %v1231 = vpack.c.b16 %v1217, %v1216
        %v1232 = vpack.c.b16 %v1219, %v1218
        %v1233 = vpack.c.b16 %v1221, %v1220
        %v1234 = vpack.c.b16 %v1223, %v1222
        %v1235 = vpack.c.b16 %v1225, %v1224
        %v1236 = vpack.c.b16 %v1227, %v1226
        %v1237 = vpack.c.b16 %v1229, %v1228
        %1246 = vmatprep.subr.bf16.mxu0 0
        %1247 = vmatpush1.bf16.msra.mxu0 %v1237
        %1248 = vmatprep.subr.bf16.mxu0 0
        %1249 = vmatpush1.bf16.msra.mxu0 %v1236
        %1250 = vmatprep.subr.bf16.mxu0 0
        %1251 = vmatpush1.bf16.msra.mxu0 %v1235
        %1252 = vmatprep.subr.bf16.mxu0 0
        %1253 = vmatpush1.bf16.msra.mxu0 %v1234
        %1254 = vmatprep.subr.bf16.mxu0 0
        %1255 = vmatpush1.bf16.msra.mxu0 %v1233
        %1256 = vmatprep.subr.bf16.mxu0 0
        %1257 = vmatpush1.bf16.msra.mxu0 %v1232
        %1258 = vmatprep.subr.bf16.mxu0 0
        %1259 = vmatpush1.bf16.msra.mxu0 %v1231
        %1260 = vmatprep.subr.bf16.mxu0 0
        %1261 = vmatpush1.bf16.msra.mxu0 %v1230
        %1262 = vmatprep.subr.bf16.mxu0 0
        %1263 = vmatpush2.bf16.msra.mxu0 0
        %1264 = vmatprep.subr.bf16.mxu0 0
        %1265 = vmatpush2.bf16.msra.mxu0 0
        %1266 = vmatprep.subr.bf16.mxu0 0
        %1267 = vmatpush2.bf16.msra.mxu0 0
        %1268 = vmatprep.subr.bf16.mxu0 0
        %1269 = vmatpush2.bf16.msra.mxu0 0
        %1270 = vmatprep.subr.bf16.mxu0 0
        %1271 = vmatpush2.bf16.msra.mxu0 0
        %1272 = vmatprep.subr.bf16.mxu0 0
        %1273 = vmatpush2.bf16.msra.mxu0 0
        %1274 = vmatprep.subr.bf16.mxu0 0
        %1275 = vmatpush2.bf16.msra.mxu0 0
        %1276 = vmatprep.subr.bf16.mxu0 0
        %1277 = vmatpush2.bf16.msra.mxu0 0
        %1278 = vmatprep.mubr.bf16.mxu0 0
        %1279 = vmatmul.mubr.bf16.gmra.mxu0 %v1190
        %v1280 = vpop.f32.mrf.mxu0
        %v1281 = vadd.f32 0.0, %v1280
        %v1282 = vpop.f32.mrf.mxu0
        %v1283 = vpop.f32.mrf.mxu0
        %v1284 = vadd.f32 0.0, %v1283
        %v1285 = vpop.f32.mrf.mxu0
        %1286 = vmatprep.mubr.bf16.mxu0 0
        %1287 = vmatmul.mubr.bf16.gmra.mxu0 %v1191
        %v1288 = vpop.f32.mrf.mxu0
        %v1289 = vadd.f32 0.0, %v1288
        %v1290 = vpop.f32.mrf.mxu0
        %v1291 = vpop.f32.mrf.mxu0
        %v1292 = vadd.f32 0.0, %v1291
        %v1293 = vpop.f32.mrf.mxu0
        %1294 = vmatprep.mubr.bf16.mxu0 0
        %1295 = vmatmul.mubr.bf16.gmra.mxu0 %v1192
        %v1296 = vpop.f32.mrf.mxu0
        %v1297 = vadd.f32 0.0, %v1296
        %v1298 = vpop.f32.mrf.mxu0
        %v1299 = vpop.f32.mrf.mxu0
        %v1300 = vadd.f32 0.0, %v1299
        %v1301 = vpop.f32.mrf.mxu0
        %1302 = vmatprep.mubr.bf16.mxu0 0
        %1303 = vmatmul.mubr.bf16.gmra.mxu0 %v1193
        %v1304 = vpop.f32.mrf.mxu0
        %v1305 = vadd.f32 0.0, %v1304
        %v1306 = vpop.f32.mrf.mxu0
        %v1307 = vpop.f32.mrf.mxu0
        %v1308 = vadd.f32 0.0, %v1307
        %v1309 = vpop.f32.mrf.mxu0
        %1310 = vdwg.mxu0
        %vm1311 = vcmask 523264
        %v1312 = vsel %vm1311, %v1281, -inf
        %1313 = vmax.xlane.f32.xlu0 %v1312
        %v1314 = vpop.xlane.xlu0 %1313
        %v1315 = vsel %vm1311, %v1284, -inf
        %1316 = vmax.xlane.f32.xlu0 %v1315
        %v1317 = vpop.xlane.xlu0 %1316
        %v1318 = vsel %vm1311, %v1289, -inf
        %1319 = vmax.xlane.f32.xlu0 %v1318
        %v1320 = vpop.xlane.xlu0 %1319
        %v1321 = vsel %vm1311, %v1292, -inf
        %1322 = vmax.xlane.f32.xlu0 %v1321
        %v1323 = vpop.xlane.xlu0 %1322
        %v1324 = vsel %vm1311, %v1297, -inf
        %1325 = vmax.xlane.f32.xlu0 %v1324
        %v1326 = vpop.xlane.xlu0 %1325
        %v1327 = vsel %vm1311, %v1300, -inf
        %1328 = vmax.xlane.f32.xlu0 %v1327
        %v1329 = vpop.xlane.xlu0 %1328
        %v1330 = vsel %vm1311, %v1305, -inf
        %1331 = vmax.xlane.f32.xlu0 %v1330
        %v1332 = vpop.xlane.xlu0 %1331
        %v1333 = vsel %vm1311, %v1308, -inf
        %1334 = vmax.xlane.f32.xlu0 %v1333
        %v1335 = vpop.xlane.xlu0 %1334
        %v1336 = vsub.f32 %v1281, %v1314
        %v1337 = vsub.f32 %v1284, %v1317
        %v1338 = vsub.f32 %v1289, %v1320
        %v1339 = vsub.f32 %v1292, %v1323
        %v1340 = vsub.f32 %v1297, %v1326
        %v1341 = vsub.f32 %v1300, %v1329
        %v1342 = vsub.f32 %v1305, %v1332
        %v1343 = vsub.f32 %v1308, %v1335
        %v1344 = vmul.f32 %v1336, 1.442695
        %v1345 = vpow.pop %v1344
        %v1346 = vmul.f32 %v1337, 1.442695
        %v1347 = vpow.pop %v1346
        %v1348 = vmul.f32 %v1338, 1.442695
        %v1349 = vpow.pop %v1348
        %v1350 = vmul.f32 %v1339, 1.442695
        %v1351 = vpow.pop %v1350
        %v1352 = vmul.f32 %v1340, 1.442695
        %v1353 = vpow.pop %v1352
        %v1354 = vmul.f32 %v1341, 1.442695
        %v1355 = vpow.pop %v1354
        %v1356 = vmul.f32 %v1342, 1.442695
        %v1357 = vpow.pop %v1356
        %v1358 = vmul.f32 %v1343, 1.442695
        %v1359 = vpow.pop %v1358
        %v1360 = vsel %vm1311, %v1345, 0.0
        %1361 = vadd.xlane.f32.xlu0 %v1360
        %v1362 = vpop.xlane.xlu0 %1361
        %v1363 = vsel %vm1311, %v1347, 0.0
        %1364 = vadd.xlane.f32.xlu0 %v1363
        %v1365 = vpop.xlane.xlu0 %1364
        %v1366 = vsel %vm1311, %v1349, 0.0
        %1367 = vadd.xlane.f32.xlu0 %v1366
        %v1368 = vpop.xlane.xlu0 %1367
        %v1369 = vsel %vm1311, %v1351, 0.0
        %1370 = vadd.xlane.f32.xlu0 %v1369
        %v1371 = vpop.xlane.xlu0 %1370
        %v1372 = vsel %vm1311, %v1353, 0.0
        %1373 = vadd.xlane.f32.xlu0 %v1372
        %v1374 = vpop.xlane.xlu0 %1373
        %v1375 = vsel %vm1311, %v1355, 0.0
        %1376 = vadd.xlane.f32.xlu0 %v1375
        %v1377 = vpop.xlane.xlu0 %1376
        %v1378 = vsel %vm1311, %v1357, 0.0
        %1379 = vadd.xlane.f32.xlu0 %v1378
        %v1380 = vpop.xlane.xlu0 %1379
        %v1381 = vsel %vm1311, %v1359, 0.0
        %1382 = vadd.xlane.f32.xlu0 %v1381
        %v1383 = vpop.xlane.xlu0 %1382
        %v1384 = vpack.c.bf16 %v1347, %v1345
        %v1385 = vpack.c.bf16 %v1351, %v1349
        %v1386 = vpack.c.bf16 %v1355, %v1353
        %v1387 = vpack.c.bf16 %v1359, %v1357
        %v1388 = vld [vmem:[#allocation6] sm:$0xf]
        %v1389 = vld [vmem:[#allocation6 + $0x4] sm:$0xf]
        %v1390 = vld [vmem:[#allocation6 + $0x8] sm:$0xf]
        %v1391 = vld [vmem:[#allocation6 + $0xc] sm:$0xf]
        %v1392 = vld [vmem:[#allocation6 + $0x10] sm:$0xf]
        %v1393 = vld [vmem:[#allocation6 + $0x14] sm:$0xf]
        %v1394 = vld [vmem:[#allocation6 + $0x18] sm:$0xf]
        %v1395 = vld [vmem:[#allocation6 + $0x1c] sm:$0xf]
        %v1404 = vunpack.c.l.b16 %v1388
        %v1405 = vunpack.c.l.b16 %v1389
        %v1406 = vunpack.c.l.b16 %v1390
        %v1407 = vunpack.c.l.b16 %v1391
        %v1408 = vunpack.c.l.b16 %v1392
        %v1409 = vunpack.c.l.b16 %v1393
        %v1410 = vunpack.c.l.b16 %v1394
        %v1411 = vunpack.c.l.b16 %v1395
        %v1412 = vpack.c.b16 %v1405, %v1404
        %v1413 = vpack.c.b16 %v1407, %v1406
        %v1414 = vpack.c.b16 %v1409, %v1408
        %v1415 = vpack.c.b16 %v1411, %v1410
        %v1421 = vsel %vm1311, %v1384, 0
        %v1424 = vsel %vm1311, %v1385, 0
        %v1427 = vsel %vm1311, %v1386, 0
        %v1430 = vsel %vm1311, %v1387, 0
        %1432 = vmatprep.subr.bf16.mxu0 0
        %1433 = vmatpush1.bf16.msra.mxu0 0
        %1434 = vmatprep.subr.bf16.mxu0 0
        %1435 = vmatpush1.bf16.msra.mxu0 0
        %1436 = vmatprep.subr.bf16.mxu0 0
        %1437 = vmatpush1.bf16.msra.mxu0 0
        %1438 = vmatprep.subr.bf16.mxu0 0
        %1439 = vmatpush1.bf16.msra.mxu0 0
        %1440 = vmatprep.subr.bf16.mxu0 0
        %1441 = vmatpush1.bf16.msra.mxu0 %v1415
        %1442 = vmatprep.subr.bf16.mxu0 0
        %1443 = vmatpush1.bf16.msra.mxu0 %v1414
        %1444 = vmatprep.subr.bf16.mxu0 0
        %1445 = vmatpush1.bf16.msra.mxu0 %v1413
        %1446 = vmatprep.subr.bf16.mxu0 0
        %1447 = vmatpush1.bf16.msra.mxu0 %v1412
        %1448 = vmatprep.subr.bf16.mxu0 0
        %1449 = vmatpush2.bf16.msra.mxu0 0
        %1450 = vmatprep.subr.bf16.mxu0 0
        %1451 = vmatpush2.bf16.msra.mxu0 0
        %1452 = vmatprep.subr.bf16.mxu0 0
        %1453 = vmatpush2.bf16.msra.mxu0 0
        %1454 = vmatprep.subr.bf16.mxu0 0
        %1455 = vmatpush2.bf16.msra.mxu0 0
        %1456 = vmatprep.subr.bf16.mxu0 0
        %1457 = vmatpush2.bf16.msra.mxu0 0
        %1458 = vmatprep.subr.bf16.mxu0 0
        %1459 = vmatpush2.bf16.msra.mxu0 0
        %1460 = vmatprep.subr.bf16.mxu0 0
        %1461 = vmatpush2.bf16.msra.mxu0 0
        %1462 = vmatprep.subr.bf16.mxu0 0
        %1463 = vmatpush2.bf16.msra.mxu0 0
        %1464 = vmatprep.mubr.bf16.mxu0 0
        %1465 = vmatmul.mubr.bf16.gmra.mxu0 %v1421
        %v1466 = vpop.f32.mrf.mxu0
        %v1467 = vadd.f32 0.0, %v1466
        %v1468 = vpop.f32.mrf.mxu0
        %v1469 = vpop.f32.mrf.mxu0
        %v1470 = vadd.f32 0.0, %v1469
        %v1471 = vpop.f32.mrf.mxu0
        %1472 = vmatprep.mubr.bf16.mxu0 0
        %1473 = vmatmul.mubr.bf16.gmra.mxu0 %v1424
        %v1474 = vpop.f32.mrf.mxu0
        %v1475 = vadd.f32 0.0, %v1474
        %v1476 = vpop.f32.mrf.mxu0
        %v1477 = vpop.f32.mrf.mxu0
        %v1478 = vadd.f32 0.0, %v1477
        %v1479 = vpop.f32.mrf.mxu0
        %1480 = vmatprep.mubr.bf16.mxu0 0
        %1481 = vmatmul.mubr.bf16.gmra.mxu0 %v1427
        %v1482 = vpop.f32.mrf.mxu0
        %v1483 = vadd.f32 0.0, %v1482
        %v1484 = vpop.f32.mrf.mxu0
        %v1485 = vpop.f32.mrf.mxu0
        %v1486 = vadd.f32 0.0, %v1485
        %v1487 = vpop.f32.mrf.mxu0
        %1488 = vmatprep.mubr.bf16.mxu0 0
        %1489 = vmatmul.mubr.bf16.gmra.mxu0 %v1430
        %v1490 = vpop.f32.mrf.mxu0
        %v1491 = vadd.f32 0.0, %v1490
        %v1492 = vpop.f32.mrf.mxu0
        %v1493 = vpop.f32.mrf.mxu0
        %v1494 = vadd.f32 0.0, %v1493
        %v1495 = vpop.f32.mrf.mxu0
        %1496 = vdwg.mxu0
        %v1497 = vrcp.pop %v1362
        %v1498 = vmul.f32 %v1467, %v1497
        %v1499 = vrcp.pop %v1365
        %v1500 = vmul.f32 %v1470, %v1499
        %v1501 = vrcp.pop %v1368
        %v1502 = vmul.f32 %v1475, %v1501
        %v1503 = vrcp.pop %v1371
        %v1504 = vmul.f32 %v1478, %v1503
        %v1505 = vrcp.pop %v1374
        %v1506 = vmul.f32 %v1483, %v1505
        %v1507 = vrcp.pop %v1377
        %v1508 = vmul.f32 %v1486, %v1507
        %v1509 = vrcp.pop %v1380
        %v1510 = vmul.f32 %v1491, %v1509
        %v1511 = vrcp.pop %v1383
        %v1512 = vmul.f32 %v1494, %v1511
        %v1513 = vpack.c.bf16 %v1500, %v1498
        %v1514 = vpack.c.bf16 %v1504, %v1502
        %v1515 = vpack.c.bf16 %v1508, %v1506
        %v1516 = vpack.c.bf16 %v1512, %v1510
        %v1517 = vld [vmem:[#allocation13] sm:$0xf]
        %v1518 = vld [vmem:[#allocation13 + $0x4] sm:$0xf]
        %v1519 = vld [vmem:[#allocation13 + $0x8] sm:$0xf]
        %v1520 = vld [vmem:[#allocation13 + $0xc] sm:$0xf]
        %v1521 = vld [vmem:[#allocation13 + $0x10] sm:$0xf]
        %v1522 = vld [vmem:[#allocation13 + $0x14] sm:$0xf]
        %v1523 = vld [vmem:[#allocation13 + $0x18] sm:$0xf]
        %v1524 = vld [vmem:[#allocation13 + $0x1c] sm:$0xf]
        %v1525 = vld [vmem:[#allocation13 + $0x20] sm:$0xf]
        %v1526 = vld [vmem:[#allocation13 + $0x24] sm:$0xf]
        %v1527 = vld [vmem:[#allocation13 + $0x28] sm:$0xf]
        %v1528 = vld [vmem:[#allocation13 + $0x2c] sm:$0xf]
        %v1529 = vld [vmem:[#allocation13 + $0x30] sm:$0xf]
        %v1530 = vld [vmem:[#allocation13 + $0x34] sm:$0xf]
        %v1531 = vld [vmem:[#allocation13 + $0x38] sm:$0xf]
        %v1532 = vld [vmem:[#allocation13 + $0x3c] sm:$0xf]
        %v1533 = vld [vmem:[%s7] sm:$0x1]
        %v1535 = vlaneseq
        %v1536 = vshrl.u32 %v1535, 7
        %v1537 = vsub.s32 0, %v1536
        %v1538 = vrot.slane %v1533, %v1537
        %v1556 = vunpack.c.l.b16 %v1517
        %v1557 = vunpack.c.l.b16 %v1518
        %v1558 = vunpack.c.l.b16 %v1519
        %v1559 = vunpack.c.l.b16 %v1520
        %v1560 = vunpack.c.l.b16 %v1521
        %v1561 = vunpack.c.l.b16 %v1522
        %v1562 = vunpack.c.l.b16 %v1523
        %v1563 = vunpack.c.l.b16 %v1524
        %v1564 = vunpack.c.l.b16 %v1525
        %v1565 = vunpack.c.l.b16 %v1526
        %v1566 = vunpack.c.l.b16 %v1527
        %v1567 = vunpack.c.l.b16 %v1528
        %v1568 = vunpack.c.l.b16 %v1529
        %v1569 = vunpack.c.l.b16 %v1530
        %v1570 = vunpack.c.l.b16 %v1531
        %v1571 = vunpack.c.l.b16 %v1532
        %v1572 = vpack.c.b16 %v1557, %v1556
        %v1573 = vpack.c.b16 %v1559, %v1558
        %v1574 = vpack.c.b16 %v1561, %v1560
        %v1575 = vpack.c.b16 %v1563, %v1562
        %v1576 = vpack.c.b16 %v1565, %v1564
        %v1577 = vpack.c.b16 %v1567, %v1566
        %v1578 = vpack.c.b16 %v1569, %v1568
        %v1579 = vpack.c.b16 %v1571, %v1570
        %1588 = vmatprep.subr.bf16.mxu0 0
        %1589 = vmatpush1.bf16.msra.mxu0 %v1579
        %1590 = vmatprep.subr.bf16.mxu0 0
        %1591 = vmatpush1.bf16.msra.mxu0 %v1578
        %1592 = vmatprep.subr.bf16.mxu0 0
        %1593 = vmatpush1.bf16.msra.mxu0 %v1577
        %1594 = vmatprep.subr.bf16.mxu0 0
        %1595 = vmatpush1.bf16.msra.mxu0 %v1576
        %1596 = vmatprep.subr.bf16.mxu0 0
        %1597 = vmatpush1.bf16.msra.mxu0 %v1575
        %1598 = vmatprep.subr.bf16.mxu0 0
        %1599 = vmatpush1.bf16.msra.mxu0 %v1574
        %1600 = vmatprep.subr.bf16.mxu0 0
        %1601 = vmatpush1.bf16.msra.mxu0 %v1573
        %1602 = vmatprep.subr.bf16.mxu0 0
        %1603 = vmatpush1.bf16.msra.mxu0 %v1572
        %1604 = vmatprep.subr.bf16.mxu0 0
        %1605 = vmatpush2.bf16.msra.mxu0 0
        %1606 = vmatprep.subr.bf16.mxu0 0
        %1607 = vmatpush2.bf16.msra.mxu0 0
        %1608 = vmatprep.subr.bf16.mxu0 0
        %1609 = vmatpush2.bf16.msra.mxu0 0
        %1610 = vmatprep.subr.bf16.mxu0 0
        %1611 = vmatpush2.bf16.msra.mxu0 0
        %1612 = vmatprep.subr.bf16.mxu0 0
        %1613 = vmatpush2.bf16.msra.mxu0 0
        %1614 = vmatprep.subr.bf16.mxu0 0
        %1615 = vmatpush2.bf16.msra.mxu0 0
        %1616 = vmatprep.subr.bf16.mxu0 0
        %1617 = vmatpush2.bf16.msra.mxu0 0
        %1618 = vmatprep.subr.bf16.mxu0 0
        %1619 = vmatpush2.bf16.msra.mxu0 0
        %1620 = vmatprep.mubr.bf16.mxu0 0
        %1621 = vmatmul.mubr.bf16.gmra.mxu0 %v1513
        %v1622 = vpop.f32.mrf.mxu0
        %v1623 = vadd.f32 %v1538, %v1622
        %v1624 = vpop.f32.mrf.mxu0
        %v1625 = vpop.f32.mrf.mxu0
        %v1626 = vadd.f32 %v1538, %v1625
        %v1627 = vpop.f32.mrf.mxu0
        %1628 = vmatprep.mubr.bf16.mxu0 0
        %1629 = vmatmul.mubr.bf16.gmra.mxu0 %v1514
        %v1630 = vpop.f32.mrf.mxu0
        %v1631 = vadd.f32 %v1538, %v1630
        %v1632 = vpop.f32.mrf.mxu0
        %v1633 = vpop.f32.mrf.mxu0
        %v1634 = vadd.f32 %v1538, %v1633
        %v1635 = vpop.f32.mrf.mxu0
        %1636 = vmatprep.mubr.bf16.mxu0 0
        %1637 = vmatmul.mubr.bf16.gmra.mxu0 %v1515
        %v1638 = vpop.f32.mrf.mxu0
        %v1639 = vadd.f32 %v1538, %v1638
        %v1640 = vpop.f32.mrf.mxu0
        %v1641 = vpop.f32.mrf.mxu0
        %v1642 = vadd.f32 %v1538, %v1641
        %v1643 = vpop.f32.mrf.mxu0
        %1644 = vmatprep.mubr.bf16.mxu0 0
        %1645 = vmatmul.mubr.bf16.gmra.mxu0 %v1516
        %v1646 = vpop.f32.mrf.mxu0
        %v1647 = vadd.f32 %v1538, %v1646
        %v1648 = vpop.f32.mrf.mxu0
        %v1649 = vpop.f32.mrf.mxu0
        %v1650 = vadd.f32 %v1538, %v1649
        %v1651 = vpop.f32.mrf.mxu0
        %1652 = vdwg.mxu0
        %s1653 = scalar_lea.vmem [#allocation2], %s1145
        %v1654 = vld [vmem:[%s1653] sm:$0xff]
        %v1655 = vld [vmem:[%s1653 + $0x8] sm:$0xff]
        %v1656 = vld [vmem:[%s1653 + $0x10] sm:$0xff]
        %v1657 = vld [vmem:[%s1653 + $0x18] sm:$0xff]
        %v1658 = vld [vmem:[%s1653 + $0x20] sm:$0xff]
        %v1659 = vld [vmem:[%s1653 + $0x28] sm:$0xff]
        %v1660 = vld [vmem:[%s1653 + $0x30] sm:$0xff]
        %v1661 = vld [vmem:[%s1653 + $0x38] sm:$0xff]
        %v1662 = vadd.f32 %v1654, %v1623
        %v1663 = vadd.f32 %v1655, %v1626
        %v1664 = vadd.f32 %v1656, %v1631
        %v1665 = vadd.f32 %v1657, %v1634
        %v1666 = vadd.f32 %v1658, %v1639
        %v1667 = vadd.f32 %v1659, %v1642
        %v1668 = vadd.f32 %v1660, %v1647
        %v1669 = vadd.f32 %v1661, %v1650
        %1670 = vst [vmem:[%s315] sm:$0xff] %v1662
        %1671 = vst [vmem:[%s315 + $0x8] sm:$0xff] %v1663
        %1672 = vst [vmem:[%s315 + $0x10] sm:$0xff] %v1664
        %1673 = vst [vmem:[%s315 + $0x18] sm:$0xff] %v1665
        %1674 = vst [vmem:[%s315 + $0x20] sm:$0xff] %v1666
        %1675 = vst [vmem:[%s315 + $0x28] sm:$0xff] %v1667
        %1676 = vst [vmem:[%s315 + $0x30] sm:$0xff] %v1668
        %1677 = vst [vmem:[%s315 + $0x38] sm:$0xff] %v1669
        %s1678 = sand.u32 %s193, 1
        %s1679 = scalar_lea.sflag [#allocation10], %s1678
        %s1680 = sand.u32 %s193, 1
        %s1681 = smul.addr %s1680, 64
        %s1682 = scalar_lea.vmem [#allocation14], %s1681
        // Predicated region
        $region69: #{tpu_custom_call.1} parent=47 // pred_check
          %p1683 = pneg %p203
        $region70: #{tpu_custom_call.1} parent=47 // pred_check_branch
          %1685 = sbr.rel (%p1683) target = $region72
        $region71: #{tpu_custom_call.1} parent=47 // pred_region
          %s1686 = smul.u32 8, %s29
          %s1688 = ssub.s32 1024, 1024
          %1689 = vsyncadd %s1679, %s1688
          %s1690 = smul.addr %s28, 8
          %s1691 = sadd.s32 %s1686, %s1690
          %s1692 = smul.addr %s1691, 128
          %s1693 = scalar_lea.hbm %s8, %s1692
          %s1694 = sshll.u32 %s1682, 4
          %s1695 = int_to_ptr.vmem [resolvable:$true] %s1694
          %1700 = dma.vmem_to_hbm [thread:$0]  %s1695, 1024, %s1693, %s1679, 128, 128, 8
        $region72: #{tpu_custom_call.1} parent=47 // pred_fallthru
          _
      $region48: #{tpu_custom_call.1} parent=5 // pred_fallthru
        _
      %p1701 = scmp.le.s32.totalorder 2, %s19
      // Predicated region
      $region73: #{tpu_custom_call.1} parent=5 // pred_check
        %p1702 = pneg %p1701
      $region74: #{tpu_custom_call.1} parent=5 // pred_check_branch
        %1704 = sbr.rel (%p1702) target = $region76
      $region75: #{tpu_custom_call.1} parent=5 // pred_region
        %s1705 = ssub.s32 %s19, 2
        // Predicated region
        $region77: #{tpu_custom_call.1} parent=75 // pred_check
          %p1706 = pneg %p209
        $region78: #{tpu_custom_call.1} parent=75 // pred_check_branch
          %1708 = sbr.rel (%p1706) target = $region80
        $region79: #{tpu_custom_call.1} parent=75 // pred_region
          %s1709 = sand.u32 %s194, 1
          %s1710 = scalar_lea.sflag [#allocation10], %s1709
          %s1711 = sand.u32 %s194, 1
          %s1712 = smul.addr %s1711, 64
          %s1713 = scalar_lea.vmem [#allocation14], %s1712
          %1714 = dma.done %s1710, 1024
        $region80: #{tpu_custom_call.1} parent=75 // pred_fallthru
          _
      $region76: #{tpu_custom_call.1} parent=5 // pred_fallthru
        _
    $region6: #{tpu_custom_call.1} parent=1 // loop_footer
      %s23 = sadd.s32 1, %s19
    $region7: #{tpu_custom_call.1} parent=1 // loop_footer_branch
      %18 = sbr.rel target = $region3
    $region8: #{tpu_custom_call.1} parent=1 // loop_exit
      _
    %1715 = vsyncpa [#allocation9], 1
    %s1716 = scalar_lea.sflag [#allocation9], 1
    %1717 = vsyncpa %s1716, 1
    %1718 = vsyncpa [#allocation12], 1
    %1719 = vsyncpa [#allocation10], 1
    %s1720 = scalar_lea.sflag [#allocation10], 1
    %1721 = vsyncpa %s1720, 1
  %1722 = vsyncmov [#allocation7]
  %s1723 = vpop.sfrf %1722
  %p1724 = scmp.eq.s32.totalorder %s1723, 0
  %p1725 = pneg %p1724
  %1727 = shalt.err (%p1725)

</llo_original>
